<compile_context>
chip_gen: v7x
topology: tpu7x:2x2x1
jax: 0.10.0
libtpu: 0.0.40
codegen_flags: <defaults>
</compile_context>

<pallas_src>
import functools

import jax
import jax.numpy as jnp
from jax import lax
from jax.experimental import pallas as pl
from jax.experimental.pallas import tpu as pltpu

HIDDEN_SIZE = 64
INPUT_SIZE = 1
TARGETS = 1
NEG_SLOPE = 0.01  # torch.nn.LeakyReLU default


def _leaky_relu(x):
    return jnp.where(x >= 0, x, NEG_SLOPE * x)


def lstm_mlp_kernel(x_ref, w_ih_ref, w_hh_ref, b_ref,
                    w1_ref, b1_ref, w2_ref, b2_ref, w3_ref, b3_ref,
                    out_ref, *, seq_len, batch):
    # x_ref:    (T*B, 1)   time-major flattened input, row t*B + b = x[b, t, 0]
    # w_ih_ref: (1, 4H)    input projection row; gate columns [f | i | o | g], g-cols pre-scaled by 2
    # w_hh_ref: (2H, 4H)   recurrent weight; rows [H, 2H) zero; same column layout / scaling
    # b_ref:    (1, 4H)    b_ih + b_hh; same column layout / scaling
    # w1_ref:   (2H, 32)   first MLP weight; rows [H, 2H) zero
    # out_ref:  (B, TARGETS)
    H = HIDDEN_SIZE
    G = 4 * H          # 256 gate lanes
    K = 2 * H          # 128-deep recurrent contraction / wide-state width
    B = batch
    T = seq_len

    w_hh = w_hh_ref[...]                                           # (K, G)
    # Hoisted broadcasts / constants (kept out of the recurrence loop).
    w_row = jnp.broadcast_to(w_ih_ref[...], (B, G))                # (B, G)
    bias = jnp.broadcast_to(b_ref[...], (B, G))                    # (B, G)
    lane = lax.broadcasted_iota(jnp.int32, (B, K), 1)
    g_scale = jnp.where(lane >= H, 2.0, 1.0).astype(jnp.float32)   # fixup for the [o | g] half:
    g_shift = jnp.where(lane >= H, -1.0, 0.0).astype(jnp.float32)  # tanh(x) = 2*sigmoid(2x) - 1

    def step(t, carry):
        h, c = carry                                               # (B, K); lanes [0,H) live
        xt = x_ref[pl.ds(t * B, B), :]                             # (B, 1)
        # gates = [f | i | o | g] pre-activations (g block doubled by wrapper pre-scale).
        gates = (jnp.dot(h, w_hh, preferred_element_type=jnp.float32)
                 + xt * w_row + bias)                              # (B, G)
        act = jax.nn.sigmoid(gates)                                # single EUP pass per step
        lo = act[:, :K]                                            # [f | i]        free whole-vreg slice
        hi = act[:, K:] * g_scale + g_shift                        # [o | tanh(g)]  VPU fixup (no 2nd EUP pass)
        prod = lo * hi                                             # [f*o | i*g]
        ig = pltpu.roll(prod, shift=H, axis=1)                     # [i*g | f*o]    single XLU roll per step
        c_new = lo * c + ig                                        # lanes [0,H): f*c + i*g
        h_new = hi * jnp.tanh(c_new)                               # lanes [0,H): o*tanh(c_new)
        # Lanes [H, K) carry bounded junk (|h_junk| <= 1); they hit zero rows of w_hh / w1.
        return h_new, c_new

    zeros = jnp.zeros((B, K), jnp.float32)
    unroll = True if T <= 16 else 8                                # cap unroll for long sequences
    h_last, _ = lax.fori_loop(0, T, step, (zeros, zeros), unroll=unroll)

    # ---- MLP head: Linear(64,32) -> LeakyReLU -> Linear(32,16) -> LeakyReLU -> Linear(16,1) ----
    h1 = _leaky_relu(jnp.dot(h_last, w1_ref[...],
                             preferred_element_type=jnp.float32) + b1_ref[...])
    h2 = _leaky_relu(jnp.dot(h1, w2_ref[...],
                             preferred_element_type=jnp.float32) + b2_ref[...])
    out = jnp.dot(h2, w3_ref[...], preferred_element_type=jnp.float32) + b3_ref[...]
    out_ref[...] = out.astype(out_ref.dtype)


def init_params(key):
    H, I = HIDDEN_SIZE, INPUT_SIZE
    ks = jax.random.split(key, 10)
    k = 1.0 / jnp.sqrt(H)

    def u(kk, shape, bound):
        return jax.random.uniform(kk, shape, jnp.float32, -bound, bound)

    # nn.LSTM parameters (PyTorch stores W_ih:(4H,I), W_hh:(4H,H)); transposed to (in, out),
    # gate column order [i | f | g | o] (PyTorch convention).
    w_ih = u(ks[0], (4 * H, I), k).T          # (1, 4H)
    w_hh = u(ks[1], (4 * H, H), k).T          # (H, 4H)
    b_ih = u(ks[2], (4 * H,), k)
    b_hh = u(ks[3], (4 * H,), k)
    b = (b_ih + b_hh).reshape(1, 4 * H)

    # MLP linears (transpose of PyTorch (out, in) weights)
    w1 = u(ks[4], (32, H), 1.0 / jnp.sqrt(H)).T          # (H, 32)
    b1 = u(ks[5], (32,), 1.0 / jnp.sqrt(H)).reshape(1, 32)
    w2 = u(ks[6], (16, 32), 1.0 / jnp.sqrt(32.)).T       # (32, 16)
    b2 = u(ks[7], (16,), 1.0 / jnp.sqrt(32.)).reshape(1, 16)
    w3 = u(ks[8], (TARGETS, 16), 1.0 / jnp.sqrt(16.)).T  # (16, 1)
    b3 = u(ks[9], (TARGETS,), 1.0 / jnp.sqrt(16.)).reshape(1, TARGETS)
    return (w_ih, w_hh, b, w1, b1, w2, b2, w3, b3)


def _prep_lstm_weights(w_ih, w_hh, b):
    """Permute gate columns [i|f|g|o] -> [f|i|o|g], double the g columns (so a single sigmoid
    recovers tanh via 2*sigmoid(2x)-1), and zero-row-pad W_hh to a 128-deep contraction."""
    H, G = HIDDEN_SIZE, 4 * HIDDEN_SIZE
    perm = jnp.concatenate([
        jnp.arange(H, 2 * H),      # f
        jnp.arange(0, H),          # i
        jnp.arange(3 * H, 4 * H),  # o
        jnp.arange(2 * H, 3 * H),  # g
    ])
    scale = jnp.concatenate([jnp.ones(3 * H), jnp.full((H,), 2.0)]).astype(jnp.float32)
    w_ih_p = w_ih[:, perm] * scale                      # (1, G)
    w_hh_p = w_hh[:, perm] * scale                      # (H, G)
    b_p = b[:, perm] * scale                            # (1, G)
    # Rows [H, 2H) are zero so the (B, 2H)-wide hidden state (junk lanes >= H) feeds the
    # matmul directly; contraction depth is 128 instead of the old 256.
    w_hh_pad = jnp.zeros((2 * H, G), jnp.float32).at[:H, :].set(w_hh_p)
    return w_ih_p, w_hh_pad, b_p


def lstm_forward(x_btI, params):
    """x_btI: (B, T, INPUT_SIZE) float32 (batch_first, like the PyTorch module)."""
    B, T, I = x_btI.shape
    assert I == INPUT_SIZE
    w_ih, w_hh, b, w1, b1, w2, b2, w3, b3 = params
    H = HIDDEN_SIZE

    w_ih_p, w_hh_pad, b_p = _prep_lstm_weights(w_ih, w_hh, b)
    # Zero-row-pad the first MLP weight so the wide hidden state feeds it with no lane slice.
    w1_pad = jnp.zeros((2 * H, w1.shape[1]), jnp.float32).at[:H, :].set(w1)
    # Compact time-major 2-D input layout: row t*B + b holds x[b, t, 0].
    x_flat = jnp.transpose(x_btI, (1, 0, 2)).reshape(T * B, 1).astype(jnp.float32)

    kernel = functools.partial(lstm_mlp_kernel, seq_len=T, batch=B)
    vmem = pl.BlockSpec(memory_space=pltpu.MemorySpace.VMEM)
    inputs = (x_flat, w_ih_p, w_hh_pad, b_p, w1_pad, b1, w2, b2, w3, b3)
    return pl.pallas_call(
        kernel,
        out_shape=jax.ShapeDtypeStruct((B, TARGETS), jnp.float32),
        in_specs=[vmem] * len(inputs),
        out_specs=vmem,
    )(*inputs)


def reference_forward(x_btI, params):
    """Pure-JAX reference matching PyTorch nn.LSTM(batch_first) + mlp(output[:, -1, :])."""
    w_ih, w_hh, b, w1, b1, w2, b2, w3, b3 = params
    B, T, _ = x_btI.shape
    H = HIDDEN_SIZE
    h = jnp.zeros((B, H), jnp.float32)
    c = jnp.zeros((B, H), jnp.float32)
    for t in range(T):
        gates = x_btI[:, t, :] @ w_ih + h @ w_hh + b
        i_g = jax.nn.sigmoid(gates[:, 0:H])
        f_g = jax.nn.sigmoid(gates[:, H:2 * H])
        g_g = jnp.tanh(gates[:, 2 * H:3 * H])
        o_g = jax.nn.sigmoid(gates[:, 3 * H:4 * H])
        c = f_g * c + i_g * g_g
        h = o_g * jnp.tanh(c)
    h1 = _leaky_relu(h @ w1 + b1)
    h2 = _leaky_relu(h1 @ w2 + b2)
    return h2 @ w3 + b3


if __name__ == "__main__":
    key = jax.random.PRNGKey(0)
    k_x, k_p = jax.random.split(key)
    B, T = 2, 8
    x = jax.random.normal(k_x, (B, T, INPUT_SIZE), jnp.float32)
    params = init_params(k_p)

    out = jax.block_until_ready(lstm_forward(x, params))
    ref = jax.block_until_ready(reference_forward(x, params))
    assert out.shape == (B, TARGETS)
    assert bool(jnp.allclose(out, ref, rtol=1e-4, atol=1e-4)), (out, ref)
    print("KERNEL_OK")
</pallas_src>

<mosaic_0001>
module attributes {stable_mosaic.version = 11 : i64} {
  func.func @lstm_mlp_kernel(%arg0: memref<16x1xf32, #tpu.memory_space<vmem>>, %arg1: memref<1x256xf32, #tpu.memory_space<vmem>>, %arg2: memref<128x256xf32, #tpu.memory_space<vmem>>, %arg3: memref<1x256xf32, #tpu.memory_space<vmem>>, %arg4: memref<128x32xf32, #tpu.memory_space<vmem>>, %arg5: memref<1x32xf32, #tpu.memory_space<vmem>>, %arg6: memref<32x16xf32, #tpu.memory_space<vmem>>, %arg7: memref<1x16xf32, #tpu.memory_space<vmem>>, %arg8: memref<16x1xf32, #tpu.memory_space<vmem>>, %arg9: memref<1x1xf32, #tpu.memory_space<vmem>>, %arg10: memref<2x1xf32, #tpu.memory_space<vmem>>) attributes {dimension_semantics = [], scalar_prefetch = 0 : i64, scratch_operands = 0 : i64, tpu.core_type = #tpu.core_type<tc>} {
    %c0 = arith.constant 0 : index
    %c0_0 = arith.constant 0 : index
    %0 = vector.load %arg2[%c0, %c0_0] : memref<128x256xf32, #tpu.memory_space<vmem>>, vector<128x256xf32>
    %c0_1 = arith.constant 0 : index
    %c0_2 = arith.constant 0 : index
    %1 = vector.load %arg1[%c0_1, %c0_2] : memref<1x256xf32, #tpu.memory_space<vmem>>, vector<1x256xf32>
    %2 = vector.shape_cast %1 : vector<1x256xf32> to vector<1x256xf32>
    %3 = vector.broadcast %2 : vector<1x256xf32> to vector<2x256xf32>
    %c0_3 = arith.constant 0 : index
    %c0_4 = arith.constant 0 : index
    %4 = vector.load %arg3[%c0_3, %c0_4] : memref<1x256xf32, #tpu.memory_space<vmem>>, vector<1x256xf32>
    %5 = vector.shape_cast %4 : vector<1x256xf32> to vector<1x256xf32>
    %6 = vector.broadcast %5 : vector<1x256xf32> to vector<2x256xf32>
    %7 = tpu.iota {dimensions = array<i32: 1>} : vector<2x128xi32>
    %c64_i32 = arith.constant 64 : i32
    %8 = vector.broadcast %c64_i32 : i32 to vector<2x128xi32>
    %9 = arith.cmpi sge, %7, %8 : vector<2x128xi32>
    %cst = arith.constant 2.000000e+00 : f32
    %cst_5 = arith.constant 1.000000e+00 : f32
    %10 = vector.broadcast %cst : f32 to vector<2x128xf32>
    %11 = vector.broadcast %cst_5 : f32 to vector<2x128xf32>
    %12 = arith.select %9, %10, %11 : vector<2x128xi1>, vector<2x128xf32>
    %c64_i32_6 = arith.constant 64 : i32
    %13 = vector.broadcast %c64_i32_6 : i32 to vector<2x128xi32>
    %14 = arith.cmpi sge, %7, %13 : vector<2x128xi32>
    %cst_7 = arith.constant -1.000000e+00 : f32
    %cst_8 = arith.constant 0.000000e+00 : f32
    %15 = vector.broadcast %cst_7 : f32 to vector<2x128xf32>
    %16 = vector.broadcast %cst_8 : f32 to vector<2x128xf32>
    %17 = arith.select %14, %15, %16 : vector<2x128xi1>, vector<2x128xf32>
    %cst_9 = arith.constant 0.000000e+00 : f32
    %18 = vector.broadcast %cst_9 : f32 to vector<2x128xf32>
    %c0_i32 = arith.constant 0 : i32
    %c2_i32 = arith.constant 2 : i32
    %19 = arith.muli %c0_i32, %c2_i32 : i32
    %20 = arith.index_cast %19 : i32 to index
    %c0_10 = arith.constant 0 : index
    %21 = vector.load %arg0[%20, %c0_10] : memref<16x1xf32, #tpu.memory_space<vmem>>, vector<2x1xf32>
    %cst_11 = arith.constant dense<0.000000e+00> : vector<2x256xf32>
    %22 = tpu.matmul %18, %0, %cst_11 {dimension_numbers = #tpu.dot_dimension_numbers<[1], [0], [0], [1], [0, 0, 1, 1], [], []>} : vector<2x128xf32>, vector<128x256xf32>, vector<2x256xf32> -> vector<2x256xf32>
    %23 = vector.broadcast %21 : vector<2x1xf32> to vector<2x256xf32>
    %24 = arith.mulf %23, %3 : vector<2x256xf32>
    %25 = arith.addf %22, %24 : vector<2x256xf32>
    %26 = arith.addf %25, %6 : vector<2x256xf32>
    %27 = arith.negf %26 : vector<2x256xf32>
    %28 = math.exp %27 : vector<2x256xf32>
    %cst_12 = arith.constant 1.000000e+00 : f32
    %29 = vector.broadcast %cst_12 : f32 to vector<2x256xf32>
    %30 = arith.addf %29, %28 : vector<2x256xf32>
    %31 = arith.divf %29, %30 : vector<2x256xf32>
    %32 = vector.extract_strided_slice %31 {offsets = [0, 0], sizes = [2, 128], strides = [1, 1]} : vector<2x256xf32> to vector<2x128xf32>
    %33 = vector.extract_strided_slice %31 {offsets = [0, 128], sizes = [2, 128], strides = [1, 1]} : vector<2x256xf32> to vector<2x128xf32>
    %34 = arith.mulf %33, %12 : vector<2x128xf32>
    %35 = arith.addf %34, %17 : vector<2x128xf32>
    %36 = arith.mulf %32, %35 : vector<2x128xf32>
    %c64_i32_13 = arith.constant 64 : i32
    %37 = tpu.dynamic_rotate %36 by %c64_i32_13 dim 1 : vector<2x128xf32>, i32 -> vector<2x128xf32>
    %38 = arith.mulf %32, %18 : vector<2x128xf32>
    %39 = arith.addf %38, %37 : vector<2x128xf32>
    %40 = math.tanh %39 : vector<2x128xf32>
    %41 = arith.mulf %35, %40 : vector<2x128xf32>
    %c1_i32 = arith.constant 1 : i32
    %c2_i32_14 = arith.constant 2 : i32
    %42 = arith.muli %c1_i32, %c2_i32_14 : i32
    %43 = arith.index_cast %42 : i32 to index
    %c0_15 = arith.constant 0 : index
    %44 = vector.load %arg0[%43, %c0_15] : memref<16x1xf32, #tpu.memory_space<vmem>>, vector<2x1xf32>
    %cst_16 = arith.constant dense<0.000000e+00> : vector<2x256xf32>
    %45 = tpu.matmul %41, %0, %cst_16 {dimension_numbers = #tpu.dot_dimension_numbers<[1], [0], [0], [1], [0, 0, 1, 1], [], []>} : vector<2x128xf32>, vector<128x256xf32>, vector<2x256xf32> -> vector<2x256xf32>
    %46 = vector.broadcast %44 : vector<2x1xf32> to vector<2x256xf32>
    %47 = arith.mulf %46, %3 : vector<2x256xf32>
    %48 = arith.addf %45, %47 : vector<2x256xf32>
    %49 = arith.addf %48, %6 : vector<2x256xf32>
    %50 = arith.negf %49 : vector<2x256xf32>
    %51 = math.exp %50 : vector<2x256xf32>
    %cst_17 = arith.constant 1.000000e+00 : f32
    %52 = vector.broadcast %cst_17 : f32 to vector<2x256xf32>
    %53 = arith.addf %52, %51 : vector<2x256xf32>
    %54 = arith.divf %52, %53 : vector<2x256xf32>
    %55 = vector.extract_strided_slice %54 {offsets = [0, 0], sizes = [2, 128], strides = [1, 1]} : vector<2x256xf32> to vector<2x128xf32>
    %56 = vector.extract_strided_slice %54 {offsets = [0, 128], sizes = [2, 128], strides = [1, 1]} : vector<2x256xf32> to vector<2x128xf32>
    %57 = arith.mulf %56, %12 : vector<2x128xf32>
    %58 = arith.addf %57, %17 : vector<2x128xf32>
    %59 = arith.mulf %55, %58 : vector<2x128xf32>
    %c64_i32_18 = arith.constant 64 : i32
    %60 = tpu.dynamic_rotate %59 by %c64_i32_18 dim 1 : vector<2x128xf32>, i32 -> vector<2x128xf32>
    %61 = arith.mulf %55, %39 : vector<2x128xf32>
    %62 = arith.addf %61, %60 : vector<2x128xf32>
    %63 = math.tanh %62 : vector<2x128xf32>
    %64 = arith.mulf %58, %63 : vector<2x128xf32>
    %c2_i32_19 = arith.constant 2 : i32
    %c2_i32_20 = arith.constant 2 : i32
    %65 = arith.muli %c2_i32_19, %c2_i32_20 : i32
    %66 = arith.index_cast %65 : i32 to index
    %c0_21 = arith.constant 0 : index
    %67 = vector.load %arg0[%66, %c0_21] : memref<16x1xf32, #tpu.memory_space<vmem>>, vector<2x1xf32>
    %cst_22 = arith.constant dense<0.000000e+00> : vector<2x256xf32>
    %68 = tpu.matmul %64, %0, %cst_22 {dimension_numbers = #tpu.dot_dimension_numbers<[1], [0], [0], [1], [0, 0, 1, 1], [], []>} : vector<2x128xf32>, vector<128x256xf32>, vector<2x256xf32> -> vector<2x256xf32>
    %69 = vector.broadcast %67 : vector<2x1xf32> to vector<2x256xf32>
    %70 = arith.mulf %69, %3 : vector<2x256xf32>
    %71 = arith.addf %68, %70 : vector<2x256xf32>
    %72 = arith.addf %71, %6 : vector<2x256xf32>
    %73 = arith.negf %72 : vector<2x256xf32>
    %74 = math.exp %73 : vector<2x256xf32>
    %cst_23 = arith.constant 1.000000e+00 : f32
    %75 = vector.broadcast %cst_23 : f32 to vector<2x256xf32>
    %76 = arith.addf %75, %74 : vector<2x256xf32>
    %77 = arith.divf %75, %76 : vector<2x256xf32>
    %78 = vector.extract_strided_slice %77 {offsets = [0, 0], sizes = [2, 128], strides = [1, 1]} : vector<2x256xf32> to vector<2x128xf32>
    %79 = vector.extract_strided_slice %77 {offsets = [0, 128], sizes = [2, 128], strides = [1, 1]} : vector<2x256xf32> to vector<2x128xf32>
    %80 = arith.mulf %79, %12 : vector<2x128xf32>
    %81 = arith.addf %80, %17 : vector<2x128xf32>
    %82 = arith.mulf %78, %81 : vector<2x128xf32>
    %c64_i32_24 = arith.constant 64 : i32
    %83 = tpu.dynamic_rotate %82 by %c64_i32_24 dim 1 : vector<2x128xf32>, i32 -> vector<2x128xf32>
    %84 = arith.mulf %78, %62 : vector<2x128xf32>
    %85 = arith.addf %84, %83 : vector<2x128xf32>
    %86 = math.tanh %85 : vector<2x128xf32>
    %87 = arith.mulf %81, %86 : vector<2x128xf32>
    %c3_i32 = arith.constant 3 : i32
    %c2_i32_25 = arith.constant 2 : i32
    %88 = arith.muli %c3_i32, %c2_i32_25 : i32
    %89 = arith.index_cast %88 : i32 to index
    %c0_26 = arith.constant 0 : index
    %90 = vector.load %arg0[%89, %c0_26] : memref<16x1xf32, #tpu.memory_space<vmem>>, vector<2x1xf32>
    %cst_27 = arith.constant dense<0.000000e+00> : vector<2x256xf32>
    %91 = tpu.matmul %87, %0, %cst_27 {dimension_numbers = #tpu.dot_dimension_numbers<[1], [0], [0], [1], [0, 0, 1, 1], [], []>} : vector<2x128xf32>, vector<128x256xf32>, vector<2x256xf32> -> vector<2x256xf32>
    %92 = vector.broadcast %90 : vector<2x1xf32> to vector<2x256xf32>
    %93 = arith.mulf %92, %3 : vector<2x256xf32>
    %94 = arith.addf %91, %93 : vector<2x256xf32>
    %95 = arith.addf %94, %6 : vector<2x256xf32>
    %96 = arith.negf %95 : vector<2x256xf32>
    %97 = math.exp %96 : vector<2x256xf32>
    %cst_28 = arith.constant 1.000000e+00 : f32
    %98 = vector.broadcast %cst_28 : f32 to vector<2x256xf32>
    %99 = arith.addf %98, %97 : vector<2x256xf32>
    %100 = arith.divf %98, %99 : vector<2x256xf32>
    %101 = vector.extract_strided_slice %100 {offsets = [0, 0], sizes = [2, 128], strides = [1, 1]} : vector<2x256xf32> to vector<2x128xf32>
    %102 = vector.extract_strided_slice %100 {offsets = [0, 128], sizes = [2, 128], strides = [1, 1]} : vector<2x256xf32> to vector<2x128xf32>
    %103 = arith.mulf %102, %12 : vector<2x128xf32>
    %104 = arith.addf %103, %17 : vector<2x128xf32>
    %105 = arith.mulf %101, %104 : vector<2x128xf32>
    %c64_i32_29 = arith.constant 64 : i32
    %106 = tpu.dynamic_rotate %105 by %c64_i32_29 dim 1 : vector<2x128xf32>, i32 -> vector<2x128xf32>
    %107 = arith.mulf %101, %85 : vector<2x128xf32>
    %108 = arith.addf %107, %106 : vector<2x128xf32>
    %109 = math.tanh %108 : vector<2x128xf32>
    %110 = arith.mulf %104, %109 : vector<2x128xf32>
    %c4_i32 = arith.constant 4 : i32
    %c2_i32_30 = arith.constant 2 : i32
    %111 = arith.muli %c4_i32, %c2_i32_30 : i32
    %112 = arith.index_cast %111 : i32 to index
    %c0_31 = arith.constant 0 : index
    %113 = vector.load %arg0[%112, %c0_31] : memref<16x1xf32, #tpu.memory_space<vmem>>, vector<2x1xf32>
    %cst_32 = arith.constant dense<0.000000e+00> : vector<2x256xf32>
    %114 = tpu.matmul %110, %0, %cst_32 {dimension_numbers = #tpu.dot_dimension_numbers<[1], [0], [0], [1], [0, 0, 1, 1], [], []>} : vector<2x128xf32>, vector<128x256xf32>, vector<2x256xf32> -> vector<2x256xf32>
    %115 = vector.broadcast %113 : vector<2x1xf32> to vector<2x256xf32>
    %116 = arith.mulf %115, %3 : vector<2x256xf32>
    %117 = arith.addf %114, %116 : vector<2x256xf32>
    %118 = arith.addf %117, %6 : vector<2x256xf32>
    %119 = arith.negf %118 : vector<2x256xf32>
    %120 = math.exp %119 : vector<2x256xf32>
    %cst_33 = arith.constant 1.000000e+00 : f32
    %121 = vector.broadcast %cst_33 : f32 to vector<2x256xf32>
    %122 = arith.addf %121, %120 : vector<2x256xf32>
    %123 = arith.divf %121, %122 : vector<2x256xf32>
    %124 = vector.extract_strided_slice %123 {offsets = [0, 0], sizes = [2, 128], strides = [1, 1]} : vector<2x256xf32> to vector<2x128xf32>
    %125 = vector.extract_strided_slice %123 {offsets = [0, 128], sizes = [2, 128], strides = [1, 1]} : vector<2x256xf32> to vector<2x128xf32>
    %126 = arith.mulf %125, %12 : vector<2x128xf32>
    %127 = arith.addf %126, %17 : vector<2x128xf32>
    %128 = arith.mulf %124, %127 : vector<2x128xf32>
    %c64_i32_34 = arith.constant 64 : i32
    %129 = tpu.dynamic_rotate %128 by %c64_i32_34 dim 1 : vector<2x128xf32>, i32 -> vector<2x128xf32>
    %130 = arith.mulf %124, %108 : vector<2x128xf32>
    %131 = arith.addf %130, %129 : vector<2x128xf32>
    %132 = math.tanh %131 : vector<2x128xf32>
    %133 = arith.mulf %127, %132 : vector<2x128xf32>
    %c5_i32 = arith.constant 5 : i32
    %c2_i32_35 = arith.constant 2 : i32
    %134 = arith.muli %c5_i32, %c2_i32_35 : i32
    %135 = arith.index_cast %134 : i32 to index
    %c0_36 = arith.constant 0 : index
    %136 = vector.load %arg0[%135, %c0_36] : memref<16x1xf32, #tpu.memory_space<vmem>>, vector<2x1xf32>
    %cst_37 = arith.constant dense<0.000000e+00> : vector<2x256xf32>
    %137 = tpu.matmul %133, %0, %cst_37 {dimension_numbers = #tpu.dot_dimension_numbers<[1], [0], [0], [1], [0, 0, 1, 1], [], []>} : vector<2x128xf32>, vector<128x256xf32>, vector<2x256xf32> -> vector<2x256xf32>
    %138 = vector.broadcast %136 : vector<2x1xf32> to vector<2x256xf32>
    %139 = arith.mulf %138, %3 : vector<2x256xf32>
    %140 = arith.addf %137, %139 : vector<2x256xf32>
    %141 = arith.addf %140, %6 : vector<2x256xf32>
    %142 = arith.negf %141 : vector<2x256xf32>
    %143 = math.exp %142 : vector<2x256xf32>
    %cst_38 = arith.constant 1.000000e+00 : f32
    %144 = vector.broadcast %cst_38 : f32 to vector<2x256xf32>
    %145 = arith.addf %144, %143 : vector<2x256xf32>
    %146 = arith.divf %144, %145 : vector<2x256xf32>
    %147 = vector.extract_strided_slice %146 {offsets = [0, 0], sizes = [2, 128], strides = [1, 1]} : vector<2x256xf32> to vector<2x128xf32>
    %148 = vector.extract_strided_slice %146 {offsets = [0, 128], sizes = [2, 128], strides = [1, 1]} : vector<2x256xf32> to vector<2x128xf32>
    %149 = arith.mulf %148, %12 : vector<2x128xf32>
    %150 = arith.addf %149, %17 : vector<2x128xf32>
    %151 = arith.mulf %147, %150 : vector<2x128xf32>
    %c64_i32_39 = arith.constant 64 : i32
    %152 = tpu.dynamic_rotate %151 by %c64_i32_39 dim 1 : vector<2x128xf32>, i32 -> vector<2x128xf32>
    %153 = arith.mulf %147, %131 : vector<2x128xf32>
    %154 = arith.addf %153, %152 : vector<2x128xf32>
    %155 = math.tanh %154 : vector<2x128xf32>
    %156 = arith.mulf %150, %155 : vector<2x128xf32>
    %c6_i32 = arith.constant 6 : i32
    %c2_i32_40 = arith.constant 2 : i32
    %157 = arith.muli %c6_i32, %c2_i32_40 : i32
    %158 = arith.index_cast %157 : i32 to index
    %c0_41 = arith.constant 0 : index
    %159 = vector.load %arg0[%158, %c0_41] : memref<16x1xf32, #tpu.memory_space<vmem>>, vector<2x1xf32>
    %cst_42 = arith.constant dense<0.000000e+00> : vector<2x256xf32>
    %160 = tpu.matmul %156, %0, %cst_42 {dimension_numbers = #tpu.dot_dimension_numbers<[1], [0], [0], [1], [0, 0, 1, 1], [], []>} : vector<2x128xf32>, vector<128x256xf32>, vector<2x256xf32> -> vector<2x256xf32>
    %161 = vector.broadcast %159 : vector<2x1xf32> to vector<2x256xf32>
    %162 = arith.mulf %161, %3 : vector<2x256xf32>
    %163 = arith.addf %160, %162 : vector<2x256xf32>
    %164 = arith.addf %163, %6 : vector<2x256xf32>
    %165 = arith.negf %164 : vector<2x256xf32>
    %166 = math.exp %165 : vector<2x256xf32>
    %cst_43 = arith.constant 1.000000e+00 : f32
    %167 = vector.broadcast %cst_43 : f32 to vector<2x256xf32>
    %168 = arith.addf %167, %166 : vector<2x256xf32>
    %169 = arith.divf %167, %168 : vector<2x256xf32>
    %170 = vector.extract_strided_slice %169 {offsets = [0, 0], sizes = [2, 128], strides = [1, 1]} : vector<2x256xf32> to vector<2x128xf32>
    %171 = vector.extract_strided_slice %169 {offsets = [0, 128], sizes = [2, 128], strides = [1, 1]} : vector<2x256xf32> to vector<2x128xf32>
    %172 = arith.mulf %171, %12 : vector<2x128xf32>
    %173 = arith.addf %172, %17 : vector<2x128xf32>
    %174 = arith.mulf %170, %173 : vector<2x128xf32>
    %c64_i32_44 = arith.constant 64 : i32
    %175 = tpu.dynamic_rotate %174 by %c64_i32_44 dim 1 : vector<2x128xf32>, i32 -> vector<2x128xf32>
    %176 = arith.mulf %170, %154 : vector<2x128xf32>
    %177 = arith.addf %176, %175 : vector<2x128xf32>
    %178 = math.tanh %177 : vector<2x128xf32>
    %179 = arith.mulf %173, %178 : vector<2x128xf32>
    %c7_i32 = arith.constant 7 : i32
    %c2_i32_45 = arith.constant 2 : i32
    %180 = arith.muli %c7_i32, %c2_i32_45 : i32
    %181 = arith.index_cast %180 : i32 to index
    %c0_46 = arith.constant 0 : index
    %182 = vector.load %arg0[%181, %c0_46] : memref<16x1xf32, #tpu.memory_space<vmem>>, vector<2x1xf32>
    %cst_47 = arith.constant dense<0.000000e+00> : vector<2x256xf32>
    %183 = tpu.matmul %179, %0, %cst_47 {dimension_numbers = #tpu.dot_dimension_numbers<[1], [0], [0], [1], [0, 0, 1, 1], [], []>} : vector<2x128xf32>, vector<128x256xf32>, vector<2x256xf32> -> vector<2x256xf32>
    %184 = vector.broadcast %182 : vector<2x1xf32> to vector<2x256xf32>
    %185 = arith.mulf %184, %3 : vector<2x256xf32>
    %186 = arith.addf %183, %185 : vector<2x256xf32>
    %187 = arith.addf %186, %6 : vector<2x256xf32>
    %188 = arith.negf %187 : vector<2x256xf32>
    %189 = math.exp %188 : vector<2x256xf32>
    %cst_48 = arith.constant 1.000000e+00 : f32
    %190 = vector.broadcast %cst_48 : f32 to vector<2x256xf32>
    %191 = arith.addf %190, %189 : vector<2x256xf32>
    %192 = arith.divf %190, %191 : vector<2x256xf32>
    %193 = vector.extract_strided_slice %192 {offsets = [0, 0], sizes = [2, 128], strides = [1, 1]} : vector<2x256xf32> to vector<2x128xf32>
    %194 = vector.extract_strided_slice %192 {offsets = [0, 128], sizes = [2, 128], strides = [1, 1]} : vector<2x256xf32> to vector<2x128xf32>
    %195 = arith.mulf %194, %12 : vector<2x128xf32>
    %196 = arith.addf %195, %17 : vector<2x128xf32>
    %197 = arith.mulf %193, %196 : vector<2x128xf32>
    %c64_i32_49 = arith.constant 64 : i32
    %198 = tpu.dynamic_rotate %197 by %c64_i32_49 dim 1 : vector<2x128xf32>, i32 -> vector<2x128xf32>
    %199 = arith.mulf %193, %177 : vector<2x128xf32>
    %200 = arith.addf %199, %198 : vector<2x128xf32>
    %201 = math.tanh %200 : vector<2x128xf32>
    %202 = arith.mulf %196, %201 : vector<2x128xf32>
    %c8_i32 = arith.constant 8 : i32
    %c0_50 = arith.constant 0 : index
    %c0_51 = arith.constant 0 : index
    %203 = vector.load %arg4[%c0_50, %c0_51] : memref<128x32xf32, #tpu.memory_space<vmem>>, vector<128x32xf32>
    %cst_52 = arith.constant dense<0.000000e+00> : vector<2x32xf32>
    %204 = tpu.matmul %202, %203, %cst_52 {dimension_numbers = #tpu.dot_dimension_numbers<[1], [0], [0], [1], [0, 0, 1, 1], [], []>} : vector<2x128xf32>, vector<128x32xf32>, vector<2x32xf32> -> vector<2x32xf32>
    %c0_53 = arith.constant 0 : index
    %c0_54 = arith.constant 0 : index
    %205 = vector.load %arg5[%c0_53, %c0_54] : memref<1x32xf32, #tpu.memory_space<vmem>>, vector<1x32xf32>
    %206 = vector.broadcast %205 : vector<1x32xf32> to vector<2x32xf32>
    %207 = arith.addf %204, %206 : vector<2x32xf32>
    %cst_55 = arith.constant 0.000000e+00 : f32
    %208 = vector.broadcast %cst_55 : f32 to vector<2x32xf32>
    %209 = arith.cmpf oge, %207, %208 : vector<2x32xf32>
    %cst_56 = arith.constant 0.00999999977 : f32
    %210 = vector.broadcast %cst_56 : f32 to vector<2x32xf32>
    %211 = arith.mulf %210, %207 : vector<2x32xf32>
    %212 = arith.select %209, %207, %211 : vector<2x32xi1>, vector<2x32xf32>
    %c0_57 = arith.constant 0 : index
    %c0_58 = arith.constant 0 : index
    %213 = vector.load %arg6[%c0_57, %c0_58] : memref<32x16xf32, #tpu.memory_space<vmem>>, vector<32x16xf32>
    %cst_59 = arith.constant dense<0.000000e+00> : vector<2x16xf32>
    %214 = tpu.matmul %212, %213, %cst_59 {dimension_numbers = #tpu.dot_dimension_numbers<[1], [0], [0], [1], [0, 0, 1, 1], [], []>} : vector<2x32xf32>, vector<32x16xf32>, vector<2x16xf32> -> vector<2x16xf32>
    %c0_60 = arith.constant 0 : index
    %c0_61 = arith.constant 0 : index
    %215 = vector.load %arg7[%c0_60, %c0_61] : memref<1x16xf32, #tpu.memory_space<vmem>>, vector<1x16xf32>
    %216 = vector.broadcast %215 : vector<1x16xf32> to vector<2x16xf32>
    %217 = arith.addf %214, %216 : vector<2x16xf32>
    %cst_62 = arith.constant 0.000000e+00 : f32
    %218 = vector.broadcast %cst_62 : f32 to vector<2x16xf32>
    %219 = arith.cmpf oge, %217, %218 : vector<2x16xf32>
    %cst_63 = arith.constant 0.00999999977 : f32
    %220 = vector.broadcast %cst_63 : f32 to vector<2x16xf32>
    %221 = arith.mulf %220, %217 : vector<2x16xf32>
    %222 = arith.select %219, %217, %221 : vector<2x16xi1>, vector<2x16xf32>
    %c0_64 = arith.constant 0 : index
    %c0_65 = arith.constant 0 : index
    %223 = vector.load %arg8[%c0_64, %c0_65] : memref<16x1xf32, #tpu.memory_space<vmem>>, vector<16x1xf32>
    %cst_66 = arith.constant dense<0.000000e+00> : vector<2x1xf32>
    %224 = tpu.matmul %222, %223, %cst_66 {dimension_numbers = #tpu.dot_dimension_numbers<[1], [0], [0], [1], [0, 0, 1, 1], [], []>} : vector<2x16xf32>, vector<16x1xf32>, vector<2x1xf32> -> vector<2x1xf32>
    %c0_67 = arith.constant 0 : index
    %c0_68 = arith.constant 0 : index
    %225 = vector.load %arg9[%c0_67, %c0_68] : memref<1x1xf32, #tpu.memory_space<vmem>>, vector<1x1xf32>
    %226 = vector.broadcast %225 : vector<1x1xf32> to vector<2x1xf32>
    %227 = arith.addf %224, %226 : vector<2x1xf32>
    %c0_69 = arith.constant 0 : index
    %c0_70 = arith.constant 0 : index
    %228 = vector.load %arg10[%c0_69, %c0_70] : memref<2x1xf32, #tpu.memory_space<vmem>>, vector<2x1xf32>
    tpu.vector_store %arg10[%c0_69, %c0_70], %227 {strides = array<i32>} : memref<2x1xf32, #tpu.memory_space<vmem>>, vector<2x1xf32>,
    return
  }
}

</mosaic_0001>

<llo_original>
// kernel: tpu_custom_call.1
$region0: #{tpu_custom_call.1}
  #allocation0 [shape = 'u32[]', space=smem, size = 0x4, offset = 0x4, fixed_abs, tag = 'smem constant byte address 0x4 - core index']
  #allocation1 [shape = 'u32[144,128]{1,0:T(1,128)}', space=vmem, size = 0x12000, scoped, tag = 'internal scratch']
  #allocation2 [shape = 'f32[1,1]{1,0:T(1,128)S(1)}', space=vmem, size = 0x200, scoped, tag = 'scoped memory for tpu_custom_call.1']
  %s0 = inlined_call_operand.vmem [shape: f32[16,1], index: 0, kind: input, shape index: {}]
  %s1 = inlined_call_operand.vmem [shape: f32[1,256], index: 1, kind: input, shape index: {}]
  %s2 = inlined_call_operand.hbm [shape: f32[128,256], index: 2, kind: input, shape index: {}]
  %s3 = inlined_call_operand.vmem [shape: f32[1,256], index: 3, kind: input, shape index: {}]
  %s4 = inlined_call_operand.vmem [shape: f32[128,32], index: 4, kind: input, shape index: {}]
  %s5 = inlined_call_operand.vmem [shape: f32[1,32], index: 5, kind: input, shape index: {}]
  %s6 = inlined_call_operand.vmem [shape: f32[32,16], index: 6, kind: input, shape index: {}]
  %s7 = inlined_call_operand.vmem [shape: f32[1,16], index: 7, kind: input, shape index: {}]
  %s8 = inlined_call_operand.vmem [shape: f32[16,1], index: 8, kind: input, shape index: {}]
  %s9 = inlined_call_operand.<no memory space> [shape: f32[1,1], index: 9, kind: input, shape index: {}]
  %s10 = inlined_call_operand.vmem [shape: f32[2,1], index: 10, kind: output, shape index: {}]
  %s11 = sld [smem:[#allocation0]]
  $region54: #{tpu_custom_call.1} parent=0
    _
  %s13 = ssub.s32 1, %s11
  %s14 = scalar_select 0, %s13, %s11
  %v15 = vstv %s9
  %16 = vst [vmem:[#allocation2] sm:$0x1] %v15
  $region1: #{tpu_custom_call.1} parent=0
    #allocation3 [shape = 'u8[131072]{0}', space=vmem, size = 0x20000, scoped, tag = 'input window, operand 2, single buffered']
    #allocation4 [shape = 's32[1]{0}', space=sflag, size = 0x4, scoped, tag = 'scoped memory for tpu_custom_call.1']
    %17 = vsyncpa [#allocation4], 0
    // Predicated region
    $region2: #{tpu_custom_call.1} parent=1 // pred_check
      _
    $region3: #{tpu_custom_call.1} parent=1 // pred_check_branch
      %19 = sbr.rel (0) target = $region5
    $region4: #{tpu_custom_call.1} parent=1 // pred_region
      _
    $region5: #{tpu_custom_call.1} parent=1 // pred_fallthru
      _
    // Predicated region
    $region6: #{tpu_custom_call.1} parent=1 // pred_check
      _
    $region7: #{tpu_custom_call.1} parent=1 // pred_check_branch
      %21 = sbr.rel (0) target = $region9
    $region8: #{tpu_custom_call.1} parent=1 // pred_region
      _
    $region9: #{tpu_custom_call.1} parent=1 // pred_fallthru
      _
    // Predicated region
    $region10: #{tpu_custom_call.1} parent=1 // pred_check
      _
    $region11: #{tpu_custom_call.1} parent=1 // pred_check_branch
      %23 = sbr.rel (0) target = $region13
    $region12: #{tpu_custom_call.1} parent=1 // pred_region
      %s25 = ssub.s32 4096, 4096
      %26 = vsyncadd [#allocation4], %s25
      %s27 = sshll.u32 [#allocation3], 4
      %s28 = int_to_ptr.vmem [resolvable:$true] %s27
      %33 = dma.hbm_to_vmem [thread:$0]  %s2, 4096, %s28, [#allocation4], 256, 256, 16
    $region13: #{tpu_custom_call.1} parent=1 // pred_fallthru
      _
    // Predicated region
    $region14: #{tpu_custom_call.1} parent=1 // pred_check
      _
    $region15: #{tpu_custom_call.1} parent=1 // pred_check_branch
      %35 = sbr.rel (0) target = $region17
    $region16: #{tpu_custom_call.1} parent=1 // pred_region
      _
    $region17: #{tpu_custom_call.1} parent=1 // pred_fallthru
      _
    // Predicated region
    $region18: #{tpu_custom_call.1} parent=1 // pred_check
      _
    $region19: #{tpu_custom_call.1} parent=1 // pred_check_branch
      %37 = sbr.rel (0) target = $region21
    $region20: #{tpu_custom_call.1} parent=1 // pred_region
      _
    $region21: #{tpu_custom_call.1} parent=1 // pred_fallthru
      _
    // Predicated region
    $region22: #{tpu_custom_call.1} parent=1 // pred_check
      _
    $region23: #{tpu_custom_call.1} parent=1 // pred_check_branch
      %39 = sbr.rel (0) target = $region25
    $region24: #{tpu_custom_call.1} parent=1 // pred_region
      _
    $region25: #{tpu_custom_call.1} parent=1 // pred_fallthru
      _
    // Predicated region
    $region26: #{tpu_custom_call.1} parent=1 // pred_check
      _
    $region27: #{tpu_custom_call.1} parent=1 // pred_check_branch
      %41 = sbr.rel (0) target = $region29
    $region28: #{tpu_custom_call.1} parent=1 // pred_region
      _
    $region29: #{tpu_custom_call.1} parent=1 // pred_fallthru
      _
    // Predicated region
    $region30: #{tpu_custom_call.1} parent=1 // pred_check
      _
    $region31: #{tpu_custom_call.1} parent=1 // pred_check_branch
      %43 = sbr.rel (0) target = $region33
    $region32: #{tpu_custom_call.1} parent=1 // pred_region
      _
    $region33: #{tpu_custom_call.1} parent=1 // pred_fallthru
      _
    // Predicated region
    $region34: #{tpu_custom_call.1} parent=1 // pred_check
      _
    $region35: #{tpu_custom_call.1} parent=1 // pred_check_branch
      %45 = sbr.rel (0) target = $region37
    $region36: #{tpu_custom_call.1} parent=1 // pred_region
      _
    $region37: #{tpu_custom_call.1} parent=1 // pred_fallthru
      _
    // Predicated region
    $region38: #{tpu_custom_call.1} parent=1 // pred_check
      _
    $region39: #{tpu_custom_call.1} parent=1 // pred_check_branch
      %47 = sbr.rel (0) target = $region41
    $region40: #{tpu_custom_call.1} parent=1 // pred_region
      _
    $region41: #{tpu_custom_call.1} parent=1 // pred_fallthru
      _
    // Predicated region
    $region42: #{tpu_custom_call.1} parent=1 // pred_check
      _
    $region43: #{tpu_custom_call.1} parent=1 // pred_check_branch
      %49 = sbr.rel (0) target = $region45
    $region44: #{tpu_custom_call.1} parent=1 // pred_region
      %50 = dma.done [#allocation4], 4096
    $region45: #{tpu_custom_call.1} parent=1 // pred_fallthru
      _
    %v51 = vld [vmem:[#allocation3] sm:$0xff]
    %v52 = vld [vmem:[#allocation3 + $0x8] sm:$0xff]
    %v53 = vld [vmem:[#allocation3 + $0x10] sm:$0xff]
    %v54 = vld [vmem:[#allocation3 + $0x18] sm:$0xff]
    %v55 = vld [vmem:[#allocation3 + $0x20] sm:$0xff]
    %v56 = vld [vmem:[#allocation3 + $0x28] sm:$0xff]
    %v57 = vld [vmem:[#allocation3 + $0x30] sm:$0xff]
    %v58 = vld [vmem:[#allocation3 + $0x38] sm:$0xff]
    %v59 = vld [vmem:[#allocation3 + $0x40] sm:$0xff]
    %v60 = vld [vmem:[#allocation3 + $0x48] sm:$0xff]
    %v61 = vld [vmem:[#allocation3 + $0x50] sm:$0xff]
    %v62 = vld [vmem:[#allocation3 + $0x58] sm:$0xff]
    %v63 = vld [vmem:[#allocation3 + $0x60] sm:$0xff]
    %v64 = vld [vmem:[#allocation3 + $0x68] sm:$0xff]
    %v65 = vld [vmem:[#allocation3 + $0x70] sm:$0xff]
    %v66 = vld [vmem:[#allocation3 + $0x78] sm:$0xff]
    %v67 = vld [vmem:[#allocation3 + $0x80] sm:$0xff]
    %v68 = vld [vmem:[#allocation3 + $0x88] sm:$0xff]
    %v69 = vld [vmem:[#allocation3 + $0x90] sm:$0xff]
    %v70 = vld [vmem:[#allocation3 + $0x98] sm:$0xff]
    %v71 = vld [vmem:[#allocation3 + $0xa0] sm:$0xff]
    %v72 = vld [vmem:[#allocation3 + $0xa8] sm:$0xff]
    %v73 = vld [vmem:[#allocation3 + $0xb0] sm:$0xff]
    %v74 = vld [vmem:[#allocation3 + $0xb8] sm:$0xff]
    %v75 = vld [vmem:[#allocation3 + $0xc0] sm:$0xff]
    %v76 = vld [vmem:[#allocation3 + $0xc8] sm:$0xff]
    %v77 = vld [vmem:[#allocation3 + $0xd0] sm:$0xff]
    %v78 = vld [vmem:[#allocation3 + $0xd8] sm:$0xff]
    %v79 = vld [vmem:[#allocation3 + $0xe0] sm:$0xff]
    %v80 = vld [vmem:[#allocation3 + $0xe8] sm:$0xff]
    %v81 = vld [vmem:[#allocation3 + $0xf0] sm:$0xff]
    %v82 = vld [vmem:[#allocation3 + $0xf8] sm:$0xff]
    %v83 = vld [vmem:[%s1] sm:$0x3]
    %v85 = vlaneseq
    %v86 = vshrl.u32 %v85, 7
    %v87 = vsub.s32 0, %v86
    %v88 = vrot.slane %v83, %v87
    %v89 = vlaneseq
    %v90 = vshrl.u32 %v89, 7
    %v91 = vsub.s32 1, %v90
    %v92 = vrot.slane %v83, %v91
    %v95 = vld [vmem:[%s3] sm:$0x3]
    %v97 = vlaneseq
    %v98 = vshrl.u32 %v97, 7
    %v99 = vsub.s32 0, %v98
    %v100 = vrot.slane %v95, %v99
    %v101 = vlaneseq
    %v102 = vshrl.u32 %v101, 7
    %v103 = vsub.s32 1, %v102
    %v104 = vrot.slane %v95, %v103
    %v107 = vlaneseq
    %v108 = vand.u32 %v107, 127
    %vm109 = vcmp.ge.s32.totalorder %v108, 64
    %v110 = vsel %vm109, 2.0, 1.0
    %v111 = vsel %vm109, -1.0, 0.0
    %v112 = vld [vmem:[%s0] sm:$0x3]
    %114 = vset.pattern.permute.xlu0 0
    %115 = vperm.xlu0 %114, %v112
    %v116 = vpop.permute.xlu0 %115
    %v118 = vmul.f32 %v116, %v88
    %v119 = vmul.f32 %v116, %v92
    %120 = vmatprep.subr.mxu0 %v52
    %121 = vmatpush1.msra.mxu0 %v51
    %122 = vmatprep.subr.mxu0 %v54
    %123 = vmatpush1.msra.mxu0 %v53
    %124 = vmatprep.subr.mxu0 %v56
    %125 = vmatpush1.msra.mxu0 %v55
    %126 = vmatprep.subr.mxu0 %v58
    %127 = vmatpush1.msra.mxu0 %v57
    %128 = vmatprep.subr.mxu0 %v60
    %129 = vmatpush1.msra.mxu0 %v59
    %130 = vmatprep.subr.mxu0 %v62
    %131 = vmatpush1.msra.mxu0 %v61
    %132 = vmatprep.subr.mxu0 %v64
    %133 = vmatpush1.msra.mxu0 %v63
    %134 = vmatprep.subr.mxu0 %v66
    %135 = vmatpush1.msra.mxu0 %v65
    %136 = vmatprep.subr.mxu0 %v68
    %137 = vmatpush1.msra.mxu0 %v67
    %138 = vmatprep.subr.mxu0 %v70
    %139 = vmatpush1.msra.mxu0 %v69
    %140 = vmatprep.subr.mxu0 %v72
    %141 = vmatpush1.msra.mxu0 %v71
    %142 = vmatprep.subr.mxu0 %v74
    %143 = vmatpush1.msra.mxu0 %v73
    %144 = vmatprep.subr.mxu0 %v76
    %145 = vmatpush1.msra.mxu0 %v75
    %146 = vmatprep.subr.mxu0 %v78
    %147 = vmatpush1.msra.mxu0 %v77
    %148 = vmatprep.subr.mxu0 %v80
    %149 = vmatpush1.msra.mxu0 %v79
    %150 = vmatprep.subr.mxu0 %v82
    %151 = vmatpush1.msra.mxu0 %v81
    %152 = vmatprep.subr.mxu0 0.0
    %153 = vmatpush1.msra.mxu0 0.0
    %154 = vmatprep.subr.mxu0 0.0
    %155 = vmatpush1.msra.mxu0 0.0
    %156 = vmatprep.subr.mxu0 0.0
    %157 = vmatpush1.msra.mxu0 0.0
    %158 = vmatprep.subr.mxu0 0.0
    %159 = vmatpush1.msra.mxu0 0.0
    %160 = vmatprep.subr.mxu0 0.0
    %161 = vmatpush1.msra.mxu0 0.0
    %162 = vmatprep.subr.mxu0 0.0
    %163 = vmatpush1.msra.mxu0 0.0
    %164 = vmatprep.subr.mxu0 0.0
    %165 = vmatpush1.msra.mxu0 0.0
    %166 = vmatprep.subr.mxu0 0.0
    %167 = vmatpush1.msra.mxu0 0.0
    %168 = vmatprep.subr.mxu0 0.0
    %169 = vmatpush1.msra.mxu0 0.0
    %170 = vmatprep.subr.mxu0 0.0
    %171 = vmatpush1.msra.mxu0 0.0
    %172 = vmatprep.subr.mxu0 0.0
    %173 = vmatpush1.msra.mxu0 0.0
    %174 = vmatprep.subr.mxu0 0.0
    %175 = vmatpush1.msra.mxu0 0.0
    %176 = vmatprep.subr.mxu0 0.0
    %177 = vmatpush1.msra.mxu0 0.0
    %178 = vmatprep.subr.mxu0 0.0
    %179 = vmatpush1.msra.mxu0 0.0
    %180 = vmatprep.subr.mxu0 0.0
    %181 = vmatpush1.msra.mxu0 0.0
    %182 = vmatprep.subr.mxu0 0.0
    %183 = vmatpush1.msra.mxu0 0.0
    %184 = vmatprep.mubr.f32.mxu0 0.0
    %185 = vmatmul.mubr.f32.gmra.mrb[0].mxu0 0.0
    %v186 = vpop.f32.mrb[0].mxu0
    %v187 = vadd.f32 %v118, %v186
    %v188 = vpop.f32.mrb[0].mxu0
    %v189 = vadd.f32 %v119, %v188
    %190 = vdwg.mxu0
    %v191 = vadd.f32 %v187, %v100
    %v192 = vadd.f32 %v189, %v104
    %v193 = vxor.u32 %v191, 2147483648
    %v194 = vxor.u32 %v192, 2147483648
    %v195 = vmul.f32 %v193, 1.442695
    %v196 = vpow.pop %v195
    %v197 = vmul.f32 %v194, 1.442695
    %v198 = vpow.pop %v197
    %v199 = vadd.f32 %v196, 1.0
    %v200 = vadd.f32 %v198, 1.0
    %v201 = vrcp.pop %v199
    %v202 = vmul.f32 1.0, %v201
    %v203 = vrcp.pop %v200
    %v204 = vmul.f32 1.0, %v203
    %v205 = vmul.f32 %v204, %v110
    %v206 = vadd.f32 %v205, %v111
    %v207 = vmul.f32 %v202, %v206
    %208 = vrot.lane.b32.xlu0 %v207, 64
    %v209 = vpop.permute.xlu0 %208
    %v210 = vmul.f32 %v202, 0.0
    %v211 = vadd.f32 %v210, %v209
    %v212 = vtanh.pop %v211
    %v213 = vmul.f32 %v206, %v212
    %v214 = vld [vmem:[%s0 + $0x2] sm:$0x3]
    %216 = vset.pattern.permute.xlu0 0
    %217 = vperm.xlu0 %216, %v214
    %v218 = vpop.permute.xlu0 %217
    %v220 = vmul.f32 %v218, %v88
    %v221 = vmul.f32 %v218, %v92
    %222 = vmatprep.subr.mxu0 %v52
    %223 = vmatpush1.msra.mxu0 %v51
    %224 = vmatprep.subr.mxu0 %v54
    %225 = vmatpush1.msra.mxu0 %v53
    %226 = vmatprep.subr.mxu0 %v56
    %227 = vmatpush1.msra.mxu0 %v55
    %228 = vmatprep.subr.mxu0 %v58
    %229 = vmatpush1.msra.mxu0 %v57
    %230 = vmatprep.subr.mxu0 %v60
    %231 = vmatpush1.msra.mxu0 %v59
    %232 = vmatprep.subr.mxu0 %v62
    %233 = vmatpush1.msra.mxu0 %v61
    %234 = vmatprep.subr.mxu0 %v64
    %235 = vmatpush1.msra.mxu0 %v63
    %236 = vmatprep.subr.mxu0 %v66
    %237 = vmatpush1.msra.mxu0 %v65
    %238 = vmatprep.subr.mxu0 %v68
    %239 = vmatpush1.msra.mxu0 %v67
    %240 = vmatprep.subr.mxu0 %v70
    %241 = vmatpush1.msra.mxu0 %v69
    %242 = vmatprep.subr.mxu0 %v72
    %243 = vmatpush1.msra.mxu0 %v71
    %244 = vmatprep.subr.mxu0 %v74
    %245 = vmatpush1.msra.mxu0 %v73
    %246 = vmatprep.subr.mxu0 %v76
    %247 = vmatpush1.msra.mxu0 %v75
    %248 = vmatprep.subr.mxu0 %v78
    %249 = vmatpush1.msra.mxu0 %v77
    %250 = vmatprep.subr.mxu0 %v80
    %251 = vmatpush1.msra.mxu0 %v79
    %252 = vmatprep.subr.mxu0 %v82
    %253 = vmatpush1.msra.mxu0 %v81
    %254 = vmatprep.subr.mxu0 0.0
    %255 = vmatpush1.msra.mxu0 0.0
    %256 = vmatprep.subr.mxu0 0.0
    %257 = vmatpush1.msra.mxu0 0.0
    %258 = vmatprep.subr.mxu0 0.0
    %259 = vmatpush1.msra.mxu0 0.0
    %260 = vmatprep.subr.mxu0 0.0
    %261 = vmatpush1.msra.mxu0 0.0
    %262 = vmatprep.subr.mxu0 0.0
    %263 = vmatpush1.msra.mxu0 0.0
    %264 = vmatprep.subr.mxu0 0.0
    %265 = vmatpush1.msra.mxu0 0.0
    %266 = vmatprep.subr.mxu0 0.0
    %267 = vmatpush1.msra.mxu0 0.0
    %268 = vmatprep.subr.mxu0 0.0
    %269 = vmatpush1.msra.mxu0 0.0
    %270 = vmatprep.subr.mxu0 0.0
    %271 = vmatpush1.msra.mxu0 0.0
    %272 = vmatprep.subr.mxu0 0.0
    %273 = vmatpush1.msra.mxu0 0.0
    %274 = vmatprep.subr.mxu0 0.0
    %275 = vmatpush1.msra.mxu0 0.0
    %276 = vmatprep.subr.mxu0 0.0
    %277 = vmatpush1.msra.mxu0 0.0
    %278 = vmatprep.subr.mxu0 0.0
    %279 = vmatpush1.msra.mxu0 0.0
    %280 = vmatprep.subr.mxu0 0.0
    %281 = vmatpush1.msra.mxu0 0.0
    %282 = vmatprep.subr.mxu0 0.0
    %283 = vmatpush1.msra.mxu0 0.0
    %284 = vmatprep.subr.mxu0 0.0
    %285 = vmatpush1.msra.mxu0 0.0
    %286 = vmatprep.mubr.f32.mxu0 0.0
    %287 = vmatmul.mubr.f32.gmra.mrb[0].mxu0 %v213
    %v288 = vpop.f32.mrb[0].mxu0
    %v289 = vadd.f32 %v220, %v288
    %v290 = vpop.f32.mrb[0].mxu0
    %v291 = vadd.f32 %v221, %v290
    %292 = vdwg.mxu0
    %v293 = vadd.f32 %v289, %v100
    %v294 = vadd.f32 %v291, %v104
    %v295 = vxor.u32 %v293, 2147483648
    %v296 = vxor.u32 %v294, 2147483648
    %v297 = vmul.f32 %v295, 1.442695
    %v298 = vpow.pop %v297
    %v299 = vmul.f32 %v296, 1.442695
    %v300 = vpow.pop %v299
    %v301 = vadd.f32 %v298, 1.0
    %v302 = vadd.f32 %v300, 1.0
    %v303 = vrcp.pop %v301
    %v304 = vmul.f32 1.0, %v303
    %v305 = vrcp.pop %v302
    %v306 = vmul.f32 1.0, %v305
    %v307 = vmul.f32 %v306, %v110
    %v308 = vadd.f32 %v307, %v111
    %v309 = vmul.f32 %v304, %v308
    %310 = vrot.lane.b32.xlu0 %v309, 64
    %v311 = vpop.permute.xlu0 %310
    %v312 = vmul.f32 %v304, %v211
    %v313 = vadd.f32 %v312, %v311
    %v314 = vtanh.pop %v313
    %v315 = vmul.f32 %v308, %v314
    %v316 = vld [vmem:[%s0 + $0x4] sm:$0x3]
    %318 = vset.pattern.permute.xlu0 0
    %319 = vperm.xlu0 %318, %v316
    %v320 = vpop.permute.xlu0 %319
    %v322 = vmul.f32 %v320, %v88
    %v323 = vmul.f32 %v320, %v92
    %324 = vmatprep.subr.mxu0 %v52
    %325 = vmatpush1.msra.mxu0 %v51
    %326 = vmatprep.subr.mxu0 %v54
    %327 = vmatpush1.msra.mxu0 %v53
    %328 = vmatprep.subr.mxu0 %v56
    %329 = vmatpush1.msra.mxu0 %v55
    %330 = vmatprep.subr.mxu0 %v58
    %331 = vmatpush1.msra.mxu0 %v57
    %332 = vmatprep.subr.mxu0 %v60
    %333 = vmatpush1.msra.mxu0 %v59
    %334 = vmatprep.subr.mxu0 %v62
    %335 = vmatpush1.msra.mxu0 %v61
    %336 = vmatprep.subr.mxu0 %v64
    %337 = vmatpush1.msra.mxu0 %v63
    %338 = vmatprep.subr.mxu0 %v66
    %339 = vmatpush1.msra.mxu0 %v65
    %340 = vmatprep.subr.mxu0 %v68
    %341 = vmatpush1.msra.mxu0 %v67
    %342 = vmatprep.subr.mxu0 %v70
    %343 = vmatpush1.msra.mxu0 %v69
    %344 = vmatprep.subr.mxu0 %v72
    %345 = vmatpush1.msra.mxu0 %v71
    %346 = vmatprep.subr.mxu0 %v74
    %347 = vmatpush1.msra.mxu0 %v73
    %348 = vmatprep.subr.mxu0 %v76
    %349 = vmatpush1.msra.mxu0 %v75
    %350 = vmatprep.subr.mxu0 %v78
    %351 = vmatpush1.msra.mxu0 %v77
    %352 = vmatprep.subr.mxu0 %v80
    %353 = vmatpush1.msra.mxu0 %v79
    %354 = vmatprep.subr.mxu0 %v82
    %355 = vmatpush1.msra.mxu0 %v81
    %356 = vmatprep.subr.mxu0 0.0
    %357 = vmatpush1.msra.mxu0 0.0
    %358 = vmatprep.subr.mxu0 0.0
    %359 = vmatpush1.msra.mxu0 0.0
    %360 = vmatprep.subr.mxu0 0.0
    %361 = vmatpush1.msra.mxu0 0.0
    %362 = vmatprep.subr.mxu0 0.0
    %363 = vmatpush1.msra.mxu0 0.0
    %364 = vmatprep.subr.mxu0 0.0
    %365 = vmatpush1.msra.mxu0 0.0
    %366 = vmatprep.subr.mxu0 0.0
    %367 = vmatpush1.msra.mxu0 0.0
    %368 = vmatprep.subr.mxu0 0.0
    %369 = vmatpush1.msra.mxu0 0.0
    %370 = vmatprep.subr.mxu0 0.0
    %371 = vmatpush1.msra.mxu0 0.0
    %372 = vmatprep.subr.mxu0 0.0
    %373 = vmatpush1.msra.mxu0 0.0
    %374 = vmatprep.subr.mxu0 0.0
    %375 = vmatpush1.msra.mxu0 0.0
    %376 = vmatprep.subr.mxu0 0.0
    %377 = vmatpush1.msra.mxu0 0.0
    %378 = vmatprep.subr.mxu0 0.0
    %379 = vmatpush1.msra.mxu0 0.0
    %380 = vmatprep.subr.mxu0 0.0
    %381 = vmatpush1.msra.mxu0 0.0
    %382 = vmatprep.subr.mxu0 0.0
    %383 = vmatpush1.msra.mxu0 0.0
    %384 = vmatprep.subr.mxu0 0.0
    %385 = vmatpush1.msra.mxu0 0.0
    %386 = vmatprep.subr.mxu0 0.0
    %387 = vmatpush1.msra.mxu0 0.0
    %388 = vmatprep.mubr.f32.mxu0 0.0
    %389 = vmatmul.mubr.f32.gmra.mrb[0].mxu0 %v315
    %v390 = vpop.f32.mrb[0].mxu0
    %v391 = vadd.f32 %v322, %v390
    %v392 = vpop.f32.mrb[0].mxu0
    %v393 = vadd.f32 %v323, %v392
    %394 = vdwg.mxu0
    %v395 = vadd.f32 %v391, %v100
    %v396 = vadd.f32 %v393, %v104
    %v397 = vxor.u32 %v395, 2147483648
    %v398 = vxor.u32 %v396, 2147483648
    %v399 = vmul.f32 %v397, 1.442695
    %v400 = vpow.pop %v399
    %v401 = vmul.f32 %v398, 1.442695
    %v402 = vpow.pop %v401
    %v403 = vadd.f32 %v400, 1.0
    %v404 = vadd.f32 %v402, 1.0
    %v405 = vrcp.pop %v403
    %v406 = vmul.f32 1.0, %v405
    %v407 = vrcp.pop %v404
    %v408 = vmul.f32 1.0, %v407
    %v409 = vmul.f32 %v408, %v110
    %v410 = vadd.f32 %v409, %v111
    %v411 = vmul.f32 %v406, %v410
    %412 = vrot.lane.b32.xlu0 %v411, 64
    %v413 = vpop.permute.xlu0 %412
    %v414 = vmul.f32 %v406, %v313
    %v415 = vadd.f32 %v414, %v413
    %v416 = vtanh.pop %v415
    %v417 = vmul.f32 %v410, %v416
    %v418 = vld [vmem:[%s0 + $0x6] sm:$0x3]
    %420 = vset.pattern.permute.xlu0 0
    %421 = vperm.xlu0 %420, %v418
    %v422 = vpop.permute.xlu0 %421
    %v424 = vmul.f32 %v422, %v88
    %v425 = vmul.f32 %v422, %v92
    %426 = vmatprep.subr.mxu0 %v52
    %427 = vmatpush1.msra.mxu0 %v51
    %428 = vmatprep.subr.mxu0 %v54
    %429 = vmatpush1.msra.mxu0 %v53
    %430 = vmatprep.subr.mxu0 %v56
    %431 = vmatpush1.msra.mxu0 %v55
    %432 = vmatprep.subr.mxu0 %v58
    %433 = vmatpush1.msra.mxu0 %v57
    %434 = vmatprep.subr.mxu0 %v60
    %435 = vmatpush1.msra.mxu0 %v59
    %436 = vmatprep.subr.mxu0 %v62
    %437 = vmatpush1.msra.mxu0 %v61
    %438 = vmatprep.subr.mxu0 %v64
    %439 = vmatpush1.msra.mxu0 %v63
    %440 = vmatprep.subr.mxu0 %v66
    %441 = vmatpush1.msra.mxu0 %v65
    %442 = vmatprep.subr.mxu0 %v68
    %443 = vmatpush1.msra.mxu0 %v67
    %444 = vmatprep.subr.mxu0 %v70
    %445 = vmatpush1.msra.mxu0 %v69
    %446 = vmatprep.subr.mxu0 %v72
    %447 = vmatpush1.msra.mxu0 %v71
    %448 = vmatprep.subr.mxu0 %v74
    %449 = vmatpush1.msra.mxu0 %v73
    %450 = vmatprep.subr.mxu0 %v76
    %451 = vmatpush1.msra.mxu0 %v75
    %452 = vmatprep.subr.mxu0 %v78
    %453 = vmatpush1.msra.mxu0 %v77
    %454 = vmatprep.subr.mxu0 %v80
    %455 = vmatpush1.msra.mxu0 %v79
    %456 = vmatprep.subr.mxu0 %v82
    %457 = vmatpush1.msra.mxu0 %v81
    %458 = vmatprep.subr.mxu0 0.0
    %459 = vmatpush1.msra.mxu0 0.0
    %460 = vmatprep.subr.mxu0 0.0
    %461 = vmatpush1.msra.mxu0 0.0
    %462 = vmatprep.subr.mxu0 0.0
    %463 = vmatpush1.msra.mxu0 0.0
    %464 = vmatprep.subr.mxu0 0.0
    %465 = vmatpush1.msra.mxu0 0.0
    %466 = vmatprep.subr.mxu0 0.0
    %467 = vmatpush1.msra.mxu0 0.0
    %468 = vmatprep.subr.mxu0 0.0
    %469 = vmatpush1.msra.mxu0 0.0
    %470 = vmatprep.subr.mxu0 0.0
    %471 = vmatpush1.msra.mxu0 0.0
    %472 = vmatprep.subr.mxu0 0.0
    %473 = vmatpush1.msra.mxu0 0.0
    %474 = vmatprep.subr.mxu0 0.0
    %475 = vmatpush1.msra.mxu0 0.0
    %476 = vmatprep.subr.mxu0 0.0
    %477 = vmatpush1.msra.mxu0 0.0
    %478 = vmatprep.subr.mxu0 0.0
    %479 = vmatpush1.msra.mxu0 0.0
    %480 = vmatprep.subr.mxu0 0.0
    %481 = vmatpush1.msra.mxu0 0.0
    %482 = vmatprep.subr.mxu0 0.0
    %483 = vmatpush1.msra.mxu0 0.0
    %484 = vmatprep.subr.mxu0 0.0
    %485 = vmatpush1.msra.mxu0 0.0
    %486 = vmatprep.subr.mxu0 0.0
    %487 = vmatpush1.msra.mxu0 0.0
    %488 = vmatprep.subr.mxu0 0.0
    %489 = vmatpush1.msra.mxu0 0.0
    %490 = vmatprep.mubr.f32.mxu0 0.0
    %491 = vmatmul.mubr.f32.gmra.mrb[0].mxu0 %v417
    %v492 = vpop.f32.mrb[0].mxu0
    %v493 = vadd.f32 %v424, %v492
    %v494 = vpop.f32.mrb[0].mxu0
    %v495 = vadd.f32 %v425, %v494
    %496 = vdwg.mxu0
    %v497 = vadd.f32 %v493, %v100
    %v498 = vadd.f32 %v495, %v104
    %v499 = vxor.u32 %v497, 2147483648
    %v500 = vxor.u32 %v498, 2147483648
    %v501 = vmul.f32 %v499, 1.442695
    %v502 = vpow.pop %v501
    %v503 = vmul.f32 %v500, 1.442695
    %v504 = vpow.pop %v503
    %v505 = vadd.f32 %v502, 1.0
    %v506 = vadd.f32 %v504, 1.0
    %v507 = vrcp.pop %v505
    %v508 = vmul.f32 1.0, %v507
    %v509 = vrcp.pop %v506
    %v510 = vmul.f32 1.0, %v509
    %v511 = vmul.f32 %v510, %v110
    %v512 = vadd.f32 %v511, %v111
    %v513 = vmul.f32 %v508, %v512
    %514 = vrot.lane.b32.xlu0 %v513, 64
    %v515 = vpop.permute.xlu0 %514
    %v516 = vmul.f32 %v508, %v415
    %v517 = vadd.f32 %v516, %v515
    %v518 = vtanh.pop %v517
    %v519 = vmul.f32 %v512, %v518
    %v520 = vld [vmem:[%s0 + $0x8] sm:$0x3]
    %522 = vset.pattern.permute.xlu0 0
    %523 = vperm.xlu0 %522, %v520
    %v524 = vpop.permute.xlu0 %523
    %v526 = vmul.f32 %v524, %v88
    %v527 = vmul.f32 %v524, %v92
    %528 = vmatprep.subr.mxu0 %v52
    %529 = vmatpush1.msra.mxu0 %v51
    %530 = vmatprep.subr.mxu0 %v54
    %531 = vmatpush1.msra.mxu0 %v53
    %532 = vmatprep.subr.mxu0 %v56
    %533 = vmatpush1.msra.mxu0 %v55
    %534 = vmatprep.subr.mxu0 %v58
    %535 = vmatpush1.msra.mxu0 %v57
    %536 = vmatprep.subr.mxu0 %v60
    %537 = vmatpush1.msra.mxu0 %v59
    %538 = vmatprep.subr.mxu0 %v62
    %539 = vmatpush1.msra.mxu0 %v61
    %540 = vmatprep.subr.mxu0 %v64
    %541 = vmatpush1.msra.mxu0 %v63
    %542 = vmatprep.subr.mxu0 %v66
    %543 = vmatpush1.msra.mxu0 %v65
    %544 = vmatprep.subr.mxu0 %v68
    %545 = vmatpush1.msra.mxu0 %v67
    %546 = vmatprep.subr.mxu0 %v70
    %547 = vmatpush1.msra.mxu0 %v69
    %548 = vmatprep.subr.mxu0 %v72
    %549 = vmatpush1.msra.mxu0 %v71
    %550 = vmatprep.subr.mxu0 %v74
    %551 = vmatpush1.msra.mxu0 %v73
    %552 = vmatprep.subr.mxu0 %v76
    %553 = vmatpush1.msra.mxu0 %v75
    %554 = vmatprep.subr.mxu0 %v78
    %555 = vmatpush1.msra.mxu0 %v77
    %556 = vmatprep.subr.mxu0 %v80
    %557 = vmatpush1.msra.mxu0 %v79
    %558 = vmatprep.subr.mxu0 %v82
    %559 = vmatpush1.msra.mxu0 %v81
    %560 = vmatprep.subr.mxu0 0.0
    %561 = vmatpush1.msra.mxu0 0.0
    %562 = vmatprep.subr.mxu0 0.0
    %563 = vmatpush1.msra.mxu0 0.0
    %564 = vmatprep.subr.mxu0 0.0
    %565 = vmatpush1.msra.mxu0 0.0
    %566 = vmatprep.subr.mxu0 0.0
    %567 = vmatpush1.msra.mxu0 0.0
    %568 = vmatprep.subr.mxu0 0.0
    %569 = vmatpush1.msra.mxu0 0.0
    %570 = vmatprep.subr.mxu0 0.0
    %571 = vmatpush1.msra.mxu0 0.0
    %572 = vmatprep.subr.mxu0 0.0
    %573 = vmatpush1.msra.mxu0 0.0
    %574 = vmatprep.subr.mxu0 0.0
    %575 = vmatpush1.msra.mxu0 0.0
    %576 = vmatprep.subr.mxu0 0.0
    %577 = vmatpush1.msra.mxu0 0.0
    %578 = vmatprep.subr.mxu0 0.0
    %579 = vmatpush1.msra.mxu0 0.0
    %580 = vmatprep.subr.mxu0 0.0
    %581 = vmatpush1.msra.mxu0 0.0
    %582 = vmatprep.subr.mxu0 0.0
    %583 = vmatpush1.msra.mxu0 0.0
    %584 = vmatprep.subr.mxu0 0.0
    %585 = vmatpush1.msra.mxu0 0.0
    %586 = vmatprep.subr.mxu0 0.0
    %587 = vmatpush1.msra.mxu0 0.0
    %588 = vmatprep.subr.mxu0 0.0
    %589 = vmatpush1.msra.mxu0 0.0
    %590 = vmatprep.subr.mxu0 0.0
    %591 = vmatpush1.msra.mxu0 0.0
    %592 = vmatprep.mubr.f32.mxu0 0.0
    %593 = vmatmul.mubr.f32.gmra.mrb[0].mxu0 %v519
    %v594 = vpop.f32.mrb[0].mxu0
    %v595 = vadd.f32 %v526, %v594
    %v596 = vpop.f32.mrb[0].mxu0
    %v597 = vadd.f32 %v527, %v596
    %598 = vdwg.mxu0
    %v599 = vadd.f32 %v595, %v100
    %v600 = vadd.f32 %v597, %v104
    %v601 = vxor.u32 %v599, 2147483648
    %v602 = vxor.u32 %v600, 2147483648
    %v603 = vmul.f32 %v601, 1.442695
    %v604 = vpow.pop %v603
    %v605 = vmul.f32 %v602, 1.442695
    %v606 = vpow.pop %v605
    %v607 = vadd.f32 %v604, 1.0
    %v608 = vadd.f32 %v606, 1.0
    %v609 = vrcp.pop %v607
    %v610 = vmul.f32 1.0, %v609
    %v611 = vrcp.pop %v608
    %v612 = vmul.f32 1.0, %v611
    %v613 = vmul.f32 %v612, %v110
    %v614 = vadd.f32 %v613, %v111
    %v615 = vmul.f32 %v610, %v614
    %616 = vrot.lane.b32.xlu0 %v615, 64
    %v617 = vpop.permute.xlu0 %616
    %v618 = vmul.f32 %v610, %v517
    %v619 = vadd.f32 %v618, %v617
    %v620 = vtanh.pop %v619
    %v621 = vmul.f32 %v614, %v620
    %v622 = vld [vmem:[%s0 + $0xa] sm:$0x3]
    %624 = vset.pattern.permute.xlu0 0
    %625 = vperm.xlu0 %624, %v622
    %v626 = vpop.permute.xlu0 %625
    %v628 = vmul.f32 %v626, %v88
    %v629 = vmul.f32 %v626, %v92
    %630 = vmatprep.subr.mxu0 %v52
    %631 = vmatpush1.msra.mxu0 %v51
    %632 = vmatprep.subr.mxu0 %v54
    %633 = vmatpush1.msra.mxu0 %v53
    %634 = vmatprep.subr.mxu0 %v56
    %635 = vmatpush1.msra.mxu0 %v55
    %636 = vmatprep.subr.mxu0 %v58
    %637 = vmatpush1.msra.mxu0 %v57
    %638 = vmatprep.subr.mxu0 %v60
    %639 = vmatpush1.msra.mxu0 %v59
    %640 = vmatprep.subr.mxu0 %v62
    %641 = vmatpush1.msra.mxu0 %v61
    %642 = vmatprep.subr.mxu0 %v64
    %643 = vmatpush1.msra.mxu0 %v63
    %644 = vmatprep.subr.mxu0 %v66
    %645 = vmatpush1.msra.mxu0 %v65
    %646 = vmatprep.subr.mxu0 %v68
    %647 = vmatpush1.msra.mxu0 %v67
    %648 = vmatprep.subr.mxu0 %v70
    %649 = vmatpush1.msra.mxu0 %v69
    %650 = vmatprep.subr.mxu0 %v72
    %651 = vmatpush1.msra.mxu0 %v71
    %652 = vmatprep.subr.mxu0 %v74
    %653 = vmatpush1.msra.mxu0 %v73
    %654 = vmatprep.subr.mxu0 %v76
    %655 = vmatpush1.msra.mxu0 %v75
    %656 = vmatprep.subr.mxu0 %v78
    %657 = vmatpush1.msra.mxu0 %v77
    %658 = vmatprep.subr.mxu0 %v80
    %659 = vmatpush1.msra.mxu0 %v79
    %660 = vmatprep.subr.mxu0 %v82
    %661 = vmatpush1.msra.mxu0 %v81
    %662 = vmatprep.subr.mxu0 0.0
    %663 = vmatpush1.msra.mxu0 0.0
    %664 = vmatprep.subr.mxu0 0.0
    %665 = vmatpush1.msra.mxu0 0.0
    %666 = vmatprep.subr.mxu0 0.0
    %667 = vmatpush1.msra.mxu0 0.0
    %668 = vmatprep.subr.mxu0 0.0
    %669 = vmatpush1.msra.mxu0 0.0
    %670 = vmatprep.subr.mxu0 0.0
    %671 = vmatpush1.msra.mxu0 0.0
    %672 = vmatprep.subr.mxu0 0.0
    %673 = vmatpush1.msra.mxu0 0.0
    %674 = vmatprep.subr.mxu0 0.0
    %675 = vmatpush1.msra.mxu0 0.0
    %676 = vmatprep.subr.mxu0 0.0
    %677 = vmatpush1.msra.mxu0 0.0
    %678 = vmatprep.subr.mxu0 0.0
    %679 = vmatpush1.msra.mxu0 0.0
    %680 = vmatprep.subr.mxu0 0.0
    %681 = vmatpush1.msra.mxu0 0.0
    %682 = vmatprep.subr.mxu0 0.0
    %683 = vmatpush1.msra.mxu0 0.0
    %684 = vmatprep.subr.mxu0 0.0
    %685 = vmatpush1.msra.mxu0 0.0
    %686 = vmatprep.subr.mxu0 0.0
    %687 = vmatpush1.msra.mxu0 0.0
    %688 = vmatprep.subr.mxu0 0.0
    %689 = vmatpush1.msra.mxu0 0.0
    %690 = vmatprep.subr.mxu0 0.0
    %691 = vmatpush1.msra.mxu0 0.0
    %692 = vmatprep.subr.mxu0 0.0
    %693 = vmatpush1.msra.mxu0 0.0
    %694 = vmatprep.mubr.f32.mxu0 0.0
    %695 = vmatmul.mubr.f32.gmra.mrb[0].mxu0 %v621
    %v696 = vpop.f32.mrb[0].mxu0
    %v697 = vadd.f32 %v628, %v696
    %v698 = vpop.f32.mrb[0].mxu0
    %v699 = vadd.f32 %v629, %v698
    %700 = vdwg.mxu0
    %v701 = vadd.f32 %v697, %v100
    %v702 = vadd.f32 %v699, %v104
    %v703 = vxor.u32 %v701, 2147483648
    %v704 = vxor.u32 %v702, 2147483648
    %v705 = vmul.f32 %v703, 1.442695
    %v706 = vpow.pop %v705
    %v707 = vmul.f32 %v704, 1.442695
    %v708 = vpow.pop %v707
    %v709 = vadd.f32 %v706, 1.0
    %v710 = vadd.f32 %v708, 1.0
    %v711 = vrcp.pop %v709
    %v712 = vmul.f32 1.0, %v711
    %v713 = vrcp.pop %v710
    %v714 = vmul.f32 1.0, %v713
    %v715 = vmul.f32 %v714, %v110
    %v716 = vadd.f32 %v715, %v111
    %v717 = vmul.f32 %v712, %v716
    %718 = vrot.lane.b32.xlu0 %v717, 64
    %v719 = vpop.permute.xlu0 %718
    %v720 = vmul.f32 %v712, %v619
    %v721 = vadd.f32 %v720, %v719
    %v722 = vtanh.pop %v721
    %v723 = vmul.f32 %v716, %v722
    %v724 = vld [vmem:[%s0 + $0xc] sm:$0x3]
    %726 = vset.pattern.permute.xlu0 0
    %727 = vperm.xlu0 %726, %v724
    %v728 = vpop.permute.xlu0 %727
    %v730 = vmul.f32 %v728, %v88
    %v731 = vmul.f32 %v728, %v92
    %732 = vmatprep.subr.mxu0 %v52
    %733 = vmatpush1.msra.mxu0 %v51
    %734 = vmatprep.subr.mxu0 %v54
    %735 = vmatpush1.msra.mxu0 %v53
    %736 = vmatprep.subr.mxu0 %v56
    %737 = vmatpush1.msra.mxu0 %v55
    %738 = vmatprep.subr.mxu0 %v58
    %739 = vmatpush1.msra.mxu0 %v57
    %740 = vmatprep.subr.mxu0 %v60
    %741 = vmatpush1.msra.mxu0 %v59
    %742 = vmatprep.subr.mxu0 %v62
    %743 = vmatpush1.msra.mxu0 %v61
    %744 = vmatprep.subr.mxu0 %v64
    %745 = vmatpush1.msra.mxu0 %v63
    %746 = vmatprep.subr.mxu0 %v66
    %747 = vmatpush1.msra.mxu0 %v65
    %748 = vmatprep.subr.mxu0 %v68
    %749 = vmatpush1.msra.mxu0 %v67
    %750 = vmatprep.subr.mxu0 %v70
    %751 = vmatpush1.msra.mxu0 %v69
    %752 = vmatprep.subr.mxu0 %v72
    %753 = vmatpush1.msra.mxu0 %v71
    %754 = vmatprep.subr.mxu0 %v74
    %755 = vmatpush1.msra.mxu0 %v73
    %756 = vmatprep.subr.mxu0 %v76
    %757 = vmatpush1.msra.mxu0 %v75
    %758 = vmatprep.subr.mxu0 %v78
    %759 = vmatpush1.msra.mxu0 %v77
    %760 = vmatprep.subr.mxu0 %v80
    %761 = vmatpush1.msra.mxu0 %v79
    %762 = vmatprep.subr.mxu0 %v82
    %763 = vmatpush1.msra.mxu0 %v81
    %764 = vmatprep.subr.mxu0 0.0
    %765 = vmatpush1.msra.mxu0 0.0
    %766 = vmatprep.subr.mxu0 0.0
    %767 = vmatpush1.msra.mxu0 0.0
    %768 = vmatprep.subr.mxu0 0.0
    %769 = vmatpush1.msra.mxu0 0.0
    %770 = vmatprep.subr.mxu0 0.0
    %771 = vmatpush1.msra.mxu0 0.0
    %772 = vmatprep.subr.mxu0 0.0
    %773 = vmatpush1.msra.mxu0 0.0
    %774 = vmatprep.subr.mxu0 0.0
    %775 = vmatpush1.msra.mxu0 0.0
    %776 = vmatprep.subr.mxu0 0.0
    %777 = vmatpush1.msra.mxu0 0.0
    %778 = vmatprep.subr.mxu0 0.0
    %779 = vmatpush1.msra.mxu0 0.0
    %780 = vmatprep.subr.mxu0 0.0
    %781 = vmatpush1.msra.mxu0 0.0
    %782 = vmatprep.subr.mxu0 0.0
    %783 = vmatpush1.msra.mxu0 0.0
    %784 = vmatprep.subr.mxu0 0.0
    %785 = vmatpush1.msra.mxu0 0.0
    %786 = vmatprep.subr.mxu0 0.0
    %787 = vmatpush1.msra.mxu0 0.0
    %788 = vmatprep.subr.mxu0 0.0
    %789 = vmatpush1.msra.mxu0 0.0
    %790 = vmatprep.subr.mxu0 0.0
    %791 = vmatpush1.msra.mxu0 0.0
    %792 = vmatprep.subr.mxu0 0.0
    %793 = vmatpush1.msra.mxu0 0.0
    %794 = vmatprep.subr.mxu0 0.0
    %795 = vmatpush1.msra.mxu0 0.0
    %796 = vmatprep.mubr.f32.mxu0 0.0
    %797 = vmatmul.mubr.f32.gmra.mrb[0].mxu0 %v723
    %v798 = vpop.f32.mrb[0].mxu0
    %v799 = vadd.f32 %v730, %v798
    %v800 = vpop.f32.mrb[0].mxu0
    %v801 = vadd.f32 %v731, %v800
    %802 = vdwg.mxu0
    %v803 = vadd.f32 %v799, %v100
    %v804 = vadd.f32 %v801, %v104
    %v805 = vxor.u32 %v803, 2147483648
    %v806 = vxor.u32 %v804, 2147483648
    %v807 = vmul.f32 %v805, 1.442695
    %v808 = vpow.pop %v807
    %v809 = vmul.f32 %v806, 1.442695
    %v810 = vpow.pop %v809
    %v811 = vadd.f32 %v808, 1.0
    %v812 = vadd.f32 %v810, 1.0
    %v813 = vrcp.pop %v811
    %v814 = vmul.f32 1.0, %v813
    %v815 = vrcp.pop %v812
    %v816 = vmul.f32 1.0, %v815
    %v817 = vmul.f32 %v816, %v110
    %v818 = vadd.f32 %v817, %v111
    %v819 = vmul.f32 %v814, %v818
    %820 = vrot.lane.b32.xlu0 %v819, 64
    %v821 = vpop.permute.xlu0 %820
    %v822 = vmul.f32 %v814, %v721
    %v823 = vadd.f32 %v822, %v821
    %v824 = vtanh.pop %v823
    %v825 = vmul.f32 %v818, %v824
    %v826 = vld [vmem:[%s0 + $0xe] sm:$0x3]
    %828 = vset.pattern.permute.xlu0 0
    %829 = vperm.xlu0 %828, %v826
    %v830 = vpop.permute.xlu0 %829
    %v832 = vmul.f32 %v830, %v88
    %v833 = vmul.f32 %v830, %v92
    %834 = vmatprep.subr.mxu0 %v52
    %835 = vmatpush1.msra.mxu0 %v51
    %836 = vmatprep.subr.mxu0 %v54
    %837 = vmatpush1.msra.mxu0 %v53
    %838 = vmatprep.subr.mxu0 %v56
    %839 = vmatpush1.msra.mxu0 %v55
    %840 = vmatprep.subr.mxu0 %v58
    %841 = vmatpush1.msra.mxu0 %v57
    %842 = vmatprep.subr.mxu0 %v60
    %843 = vmatpush1.msra.mxu0 %v59
    %844 = vmatprep.subr.mxu0 %v62
    %845 = vmatpush1.msra.mxu0 %v61
    %846 = vmatprep.subr.mxu0 %v64
    %847 = vmatpush1.msra.mxu0 %v63
    %848 = vmatprep.subr.mxu0 %v66
    %849 = vmatpush1.msra.mxu0 %v65
    %850 = vmatprep.subr.mxu0 %v68
    %851 = vmatpush1.msra.mxu0 %v67
    %852 = vmatprep.subr.mxu0 %v70
    %853 = vmatpush1.msra.mxu0 %v69
    %854 = vmatprep.subr.mxu0 %v72
    %855 = vmatpush1.msra.mxu0 %v71
    %856 = vmatprep.subr.mxu0 %v74
    %857 = vmatpush1.msra.mxu0 %v73
    %858 = vmatprep.subr.mxu0 %v76
    %859 = vmatpush1.msra.mxu0 %v75
    %860 = vmatprep.subr.mxu0 %v78
    %861 = vmatpush1.msra.mxu0 %v77
    %862 = vmatprep.subr.mxu0 %v80
    %863 = vmatpush1.msra.mxu0 %v79
    %864 = vmatprep.subr.mxu0 %v82
    %865 = vmatpush1.msra.mxu0 %v81
    %866 = vmatprep.subr.mxu0 0.0
    %867 = vmatpush1.msra.mxu0 0.0
    %868 = vmatprep.subr.mxu0 0.0
    %869 = vmatpush1.msra.mxu0 0.0
    %870 = vmatprep.subr.mxu0 0.0
    %871 = vmatpush1.msra.mxu0 0.0
    %872 = vmatprep.subr.mxu0 0.0
    %873 = vmatpush1.msra.mxu0 0.0
    %874 = vmatprep.subr.mxu0 0.0
    %875 = vmatpush1.msra.mxu0 0.0
    %876 = vmatprep.subr.mxu0 0.0
    %877 = vmatpush1.msra.mxu0 0.0
    %878 = vmatprep.subr.mxu0 0.0
    %879 = vmatpush1.msra.mxu0 0.0
    %880 = vmatprep.subr.mxu0 0.0
    %881 = vmatpush1.msra.mxu0 0.0
    %882 = vmatprep.subr.mxu0 0.0
    %883 = vmatpush1.msra.mxu0 0.0
    %884 = vmatprep.subr.mxu0 0.0
    %885 = vmatpush1.msra.mxu0 0.0
    %886 = vmatprep.subr.mxu0 0.0
    %887 = vmatpush1.msra.mxu0 0.0
    %888 = vmatprep.subr.mxu0 0.0
    %889 = vmatpush1.msra.mxu0 0.0
    %890 = vmatprep.subr.mxu0 0.0
    %891 = vmatpush1.msra.mxu0 0.0
    %892 = vmatprep.subr.mxu0 0.0
    %893 = vmatpush1.msra.mxu0 0.0
    %894 = vmatprep.subr.mxu0 0.0
    %895 = vmatpush1.msra.mxu0 0.0
    %896 = vmatprep.subr.mxu0 0.0
    %897 = vmatpush1.msra.mxu0 0.0
    %898 = vmatprep.mubr.f32.mxu0 0.0
    %899 = vmatmul.mubr.f32.gmra.mrb[0].mxu0 %v825
    %v900 = vpop.f32.mrb[0].mxu0
    %v901 = vadd.f32 %v832, %v900
    %v902 = vpop.f32.mrb[0].mxu0
    %v903 = vadd.f32 %v833, %v902
    %904 = vdwg.mxu0
    %v905 = vadd.f32 %v901, %v100
    %v906 = vadd.f32 %v903, %v104
    %v907 = vxor.u32 %v905, 2147483648
    %v908 = vxor.u32 %v906, 2147483648
    %v909 = vmul.f32 %v907, 1.442695
    %v910 = vpow.pop %v909
    %v911 = vmul.f32 %v908, 1.442695
    %v912 = vpow.pop %v911
    %v913 = vadd.f32 %v910, 1.0
    %v914 = vadd.f32 %v912, 1.0
    %v915 = vrcp.pop %v913
    %v916 = vmul.f32 1.0, %v915
    %v917 = vrcp.pop %v914
    %v918 = vmul.f32 1.0, %v917
    %v919 = vmul.f32 %v918, %v110
    %v920 = vadd.f32 %v919, %v111
    %v921 = vmul.f32 %v916, %v920
    %922 = vrot.lane.b32.xlu0 %v921, 64
    %v923 = vpop.permute.xlu0 %922
    %v924 = vmul.f32 %v916, %v823
    %v925 = vadd.f32 %v924, %v923
    %v926 = vtanh.pop %v925
    %v927 = vmul.f32 %v920, %v926
    %v928 = vld [vmem:[%s4] sm:$0xff]
    %v929 = vld [vmem:[%s4 + $0x8] sm:$0xff]
    %v930 = vld [vmem:[%s4 + $0x10] sm:$0xff]
    %v931 = vld [vmem:[%s4 + $0x18] sm:$0xff]
    %v932 = vld [vmem:[%s4 + $0x20] sm:$0xff]
    %v933 = vld [vmem:[%s4 + $0x28] sm:$0xff]
    %v934 = vld [vmem:[%s4 + $0x30] sm:$0xff]
    %v935 = vld [vmem:[%s4 + $0x38] sm:$0xff]
    %v936 = vld [vmem:[%s4 + $0x40] sm:$0xff]
    %v937 = vld [vmem:[%s4 + $0x48] sm:$0xff]
    %v938 = vld [vmem:[%s4 + $0x50] sm:$0xff]
    %v939 = vld [vmem:[%s4 + $0x58] sm:$0xff]
    %v940 = vld [vmem:[%s4 + $0x60] sm:$0xff]
    %v941 = vld [vmem:[%s4 + $0x68] sm:$0xff]
    %v942 = vld [vmem:[%s4 + $0x70] sm:$0xff]
    %v943 = vld [vmem:[%s4 + $0x78] sm:$0xff]
    %v944 = vld [vmem:[%s5] sm:$0x1]
    %v946 = vlaneseq
    %v947 = vshrl.u32 %v946, 7
    %v948 = vsub.s32 0, %v947
    %v949 = vrot.slane %v944, %v948
    %951 = vmatprep.subr.mxu0 0.0
    %952 = vmatpush1.msra.mxu0 %v928
    %953 = vmatprep.subr.mxu0 0.0
    %954 = vmatpush1.msra.mxu0 %v929
    %955 = vmatprep.subr.mxu0 0.0
    %956 = vmatpush1.msra.mxu0 %v930
    %957 = vmatprep.subr.mxu0 0.0
    %958 = vmatpush1.msra.mxu0 %v931
    %959 = vmatprep.subr.mxu0 0.0
    %960 = vmatpush1.msra.mxu0 %v932
    %961 = vmatprep.subr.mxu0 0.0
    %962 = vmatpush1.msra.mxu0 %v933
    %963 = vmatprep.subr.mxu0 0.0
    %964 = vmatpush1.msra.mxu0 %v934
    %965 = vmatprep.subr.mxu0 0.0
    %966 = vmatpush1.msra.mxu0 %v935
    %967 = vmatprep.subr.mxu0 0.0
    %968 = vmatpush1.msra.mxu0 %v936
    %969 = vmatprep.subr.mxu0 0.0
    %970 = vmatpush1.msra.mxu0 %v937
    %971 = vmatprep.subr.mxu0 0.0
    %972 = vmatpush1.msra.mxu0 %v938
    %973 = vmatprep.subr.mxu0 0.0
    %974 = vmatpush1.msra.mxu0 %v939
    %975 = vmatprep.subr.mxu0 0.0
    %976 = vmatpush1.msra.mxu0 %v940
    %977 = vmatprep.subr.mxu0 0.0
    %978 = vmatpush1.msra.mxu0 %v941
    %979 = vmatprep.subr.mxu0 0.0
    %980 = vmatpush1.msra.mxu0 %v942
    %981 = vmatprep.subr.mxu0 0.0
    %982 = vmatpush1.msra.mxu0 %v943
    %983 = vmatprep.subr.mxu0 0.0
    %984 = vmatpush1.msra.mxu0 0.0
    %985 = vmatprep.subr.mxu0 0.0
    %986 = vmatpush1.msra.mxu0 0.0
    %987 = vmatprep.subr.mxu0 0.0
    %988 = vmatpush1.msra.mxu0 0.0
    %989 = vmatprep.subr.mxu0 0.0
    %990 = vmatpush1.msra.mxu0 0.0
    %991 = vmatprep.subr.mxu0 0.0
    %992 = vmatpush1.msra.mxu0 0.0
    %993 = vmatprep.subr.mxu0 0.0
    %994 = vmatpush1.msra.mxu0 0.0
    %995 = vmatprep.subr.mxu0 0.0
    %996 = vmatpush1.msra.mxu0 0.0
    %997 = vmatprep.subr.mxu0 0.0
    %998 = vmatpush1.msra.mxu0 0.0
    %999 = vmatprep.subr.mxu0 0.0
    %1000 = vmatpush1.msra.mxu0 0.0
    %1001 = vmatprep.subr.mxu0 0.0
    %1002 = vmatpush1.msra.mxu0 0.0
    %1003 = vmatprep.subr.mxu0 0.0
    %1004 = vmatpush1.msra.mxu0 0.0
    %1005 = vmatprep.subr.mxu0 0.0
    %1006 = vmatpush1.msra.mxu0 0.0
    %1007 = vmatprep.subr.mxu0 0.0
    %1008 = vmatpush1.msra.mxu0 0.0
    %1009 = vmatprep.subr.mxu0 0.0
    %1010 = vmatpush1.msra.mxu0 0.0
    %1011 = vmatprep.subr.mxu0 0.0
    %1012 = vmatpush1.msra.mxu0 0.0
    %1013 = vmatprep.subr.mxu0 0.0
    %1014 = vmatpush1.msra.mxu0 0.0
    %1015 = vmatprep.mubr.f32.mxu0 0.0
    %1016 = vmatmul.mubr.f32.gmra.mrb[0].mxu0 %v927
    %v1017 = vpop.f32.mrb[0].mxu0
    %v1018 = vadd.f32 %v949, %v1017
    %v1019 = vpop.f32.mrb[0].mxu0
    %1020 = vdwg.mxu0
    %vm1021 = vcmp.ge.f32.partialorder %v1018, 0.0
    %v1022 = vmul.f32 %v1018, 0.01
    %v1023 = vsel %vm1021, %v1018, %v1022
    %v1024 = vld [vmem:[%s6] sm:$0xff]
    %v1025 = vld [vmem:[%s6 + $0x8] sm:$0xff]
    %v1026 = vld [vmem:[%s6 + $0x10] sm:$0xff]
    %v1027 = vld [vmem:[%s6 + $0x18] sm:$0xff]
    %v1028 = vld [vmem:[%s7] sm:$0x1]
    %v1030 = vlaneseq
    %v1031 = vshrl.u32 %v1030, 7
    %v1032 = vsub.s32 0, %v1031
    %v1033 = vrot.slane %v1028, %v1032
    %vm1035 = vcmask 261120
    %v1037 = vsel %vm1035, %v1023, 0
    %1039 = vmatprep.subr.mxu0 0.0
    %1040 = vmatpush1.msra.mxu0 %v1024
    %1041 = vmatprep.subr.mxu0 0.0
    %1042 = vmatpush1.msra.mxu0 %v1025
    %1043 = vmatprep.subr.mxu0 0.0
    %1044 = vmatpush1.msra.mxu0 %v1026
    %1045 = vmatprep.subr.mxu0 0.0
    %1046 = vmatpush1.msra.mxu0 %v1027
    %1047 = vmatprep.subr.mxu0 0.0
    %1048 = vmatpush1.msra.mxu0 0.0
    %1049 = vmatprep.subr.mxu0 0.0
    %1050 = vmatpush1.msra.mxu0 0.0
    %1051 = vmatprep.subr.mxu0 0.0
    %1052 = vmatpush1.msra.mxu0 0.0
    %1053 = vmatprep.subr.mxu0 0.0
    %1054 = vmatpush1.msra.mxu0 0.0
    %1055 = vmatprep.subr.mxu0 0.0
    %1056 = vmatpush1.msra.mxu0 0.0
    %1057 = vmatprep.subr.mxu0 0.0
    %1058 = vmatpush1.msra.mxu0 0.0
    %1059 = vmatprep.subr.mxu0 0.0
    %1060 = vmatpush1.msra.mxu0 0.0
    %1061 = vmatprep.subr.mxu0 0.0
    %1062 = vmatpush1.msra.mxu0 0.0
    %1063 = vmatprep.subr.mxu0 0.0
    %1064 = vmatpush1.msra.mxu0 0.0
    %1065 = vmatprep.subr.mxu0 0.0
    %1066 = vmatpush1.msra.mxu0 0.0
    %1067 = vmatprep.subr.mxu0 0.0
    %1068 = vmatpush1.msra.mxu0 0.0
    %1069 = vmatprep.subr.mxu0 0.0
    %1070 = vmatpush1.msra.mxu0 0.0
    %1071 = vmatprep.subr.mxu0 0.0
    %1072 = vmatpush1.msra.mxu0 0.0
    %1073 = vmatprep.subr.mxu0 0.0
    %1074 = vmatpush1.msra.mxu0 0.0
    %1075 = vmatprep.subr.mxu0 0.0
    %1076 = vmatpush1.msra.mxu0 0.0
    %1077 = vmatprep.subr.mxu0 0.0
    %1078 = vmatpush1.msra.mxu0 0.0
    %1079 = vmatprep.subr.mxu0 0.0
    %1080 = vmatpush1.msra.mxu0 0.0
    %1081 = vmatprep.subr.mxu0 0.0
    %1082 = vmatpush1.msra.mxu0 0.0
    %1083 = vmatprep.subr.mxu0 0.0
    %1084 = vmatpush1.msra.mxu0 0.0
    %1085 = vmatprep.subr.mxu0 0.0
    %1086 = vmatpush1.msra.mxu0 0.0
    %1087 = vmatprep.subr.mxu0 0.0
    %1088 = vmatpush1.msra.mxu0 0.0
    %1089 = vmatprep.subr.mxu0 0.0
    %1090 = vmatpush1.msra.mxu0 0.0
    %1091 = vmatprep.subr.mxu0 0.0
    %1092 = vmatpush1.msra.mxu0 0.0
    %1093 = vmatprep.subr.mxu0 0.0
    %1094 = vmatpush1.msra.mxu0 0.0
    %1095 = vmatprep.subr.mxu0 0.0
    %1096 = vmatpush1.msra.mxu0 0.0
    %1097 = vmatprep.subr.mxu0 0.0
    %1098 = vmatpush1.msra.mxu0 0.0
    %1099 = vmatprep.subr.mxu0 0.0
    %1100 = vmatpush1.msra.mxu0 0.0
    %1101 = vmatprep.subr.mxu0 0.0
    %1102 = vmatpush1.msra.mxu0 0.0
    %1103 = vmatprep.mubr.f32.mxu0 0.0
    %1104 = vmatmul.mubr.f32.gmra.mrb[0].mxu0 %v1037
    %v1105 = vpop.f32.mrb[0].mxu0
    %v1106 = vadd.f32 %v1033, %v1105
    %v1107 = vpop.f32.mrb[0].mxu0
    %1108 = vdwg.mxu0
    %vm1109 = vcmp.ge.f32.partialorder %v1106, 0.0
    %v1110 = vmul.f32 %v1106, 0.01
    %v1111 = vsel %vm1109, %v1106, %v1110
    %v1112 = vld [vmem:[%s8] sm:$0xff]
    %v1113 = vld [vmem:[%s8 + $0x8] sm:$0xff]
    %v1114 = vld [vmem:[#allocation2] sm:$0x1]
    %v1116 = vlaneseq
    %v1117 = vshrl.u32 %v1116, 7
    %v1118 = vsub.s32 0, %v1117
    %v1119 = vrot.slane %v1114, %v1118
    %vm1121 = vcmask 130048
    %v1123 = vsel %vm1121, %v1111, 0
    %1125 = vmatprep.subr.mxu0 0.0
    %1126 = vmatpush1.msra.mxu0 %v1112
    %1127 = vmatprep.subr.mxu0 0.0
    %1128 = vmatpush1.msra.mxu0 %v1113
    %1129 = vmatprep.subr.mxu0 0.0
    %1130 = vmatpush1.msra.mxu0 0.0
    %1131 = vmatprep.subr.mxu0 0.0
    %1132 = vmatpush1.msra.mxu0 0.0
    %1133 = vmatprep.subr.mxu0 0.0
    %1134 = vmatpush1.msra.mxu0 0.0
    %1135 = vmatprep.subr.mxu0 0.0
    %1136 = vmatpush1.msra.mxu0 0.0
    %1137 = vmatprep.subr.mxu0 0.0
    %1138 = vmatpush1.msra.mxu0 0.0
    %1139 = vmatprep.subr.mxu0 0.0
    %1140 = vmatpush1.msra.mxu0 0.0
    %1141 = vmatprep.subr.mxu0 0.0
    %1142 = vmatpush1.msra.mxu0 0.0
    %1143 = vmatprep.subr.mxu0 0.0
    %1144 = vmatpush1.msra.mxu0 0.0
    %1145 = vmatprep.subr.mxu0 0.0
    %1146 = vmatpush1.msra.mxu0 0.0
    %1147 = vmatprep.subr.mxu0 0.0
    %1148 = vmatpush1.msra.mxu0 0.0
    %1149 = vmatprep.subr.mxu0 0.0
    %1150 = vmatpush1.msra.mxu0 0.0
    %1151 = vmatprep.subr.mxu0 0.0
    %1152 = vmatpush1.msra.mxu0 0.0
    %1153 = vmatprep.subr.mxu0 0.0
    %1154 = vmatpush1.msra.mxu0 0.0
    %1155 = vmatprep.subr.mxu0 0.0
    %1156 = vmatpush1.msra.mxu0 0.0
    %1157 = vmatprep.subr.mxu0 0.0
    %1158 = vmatpush1.msra.mxu0 0.0
    %1159 = vmatprep.subr.mxu0 0.0
    %1160 = vmatpush1.msra.mxu0 0.0
    %1161 = vmatprep.subr.mxu0 0.0
    %1162 = vmatpush1.msra.mxu0 0.0
    %1163 = vmatprep.subr.mxu0 0.0
    %1164 = vmatpush1.msra.mxu0 0.0
    %1165 = vmatprep.subr.mxu0 0.0
    %1166 = vmatpush1.msra.mxu0 0.0
    %1167 = vmatprep.subr.mxu0 0.0
    %1168 = vmatpush1.msra.mxu0 0.0
    %1169 = vmatprep.subr.mxu0 0.0
    %1170 = vmatpush1.msra.mxu0 0.0
    %1171 = vmatprep.subr.mxu0 0.0
    %1172 = vmatpush1.msra.mxu0 0.0
    %1173 = vmatprep.subr.mxu0 0.0
    %1174 = vmatpush1.msra.mxu0 0.0
    %1175 = vmatprep.subr.mxu0 0.0
    %1176 = vmatpush1.msra.mxu0 0.0
    %1177 = vmatprep.subr.mxu0 0.0
    %1178 = vmatpush1.msra.mxu0 0.0
    %1179 = vmatprep.subr.mxu0 0.0
    %1180 = vmatpush1.msra.mxu0 0.0
    %1181 = vmatprep.subr.mxu0 0.0
    %1182 = vmatpush1.msra.mxu0 0.0
    %1183 = vmatprep.subr.mxu0 0.0
    %1184 = vmatpush1.msra.mxu0 0.0
    %1185 = vmatprep.subr.mxu0 0.0
    %1186 = vmatpush1.msra.mxu0 0.0
    %1187 = vmatprep.subr.mxu0 0.0
    %1188 = vmatpush1.msra.mxu0 0.0
    %1189 = vmatprep.mubr.f32.mxu0 0.0
    %1190 = vmatmul.mubr.f32.gmra.mrb[0].mxu0 %v1123
    %v1191 = vpop.f32.mrb[0].mxu0
    %v1192 = vadd.f32 %v1119, %v1191
    %v1193 = vpop.f32.mrb[0].mxu0
    %1194 = vdwg.mxu0
    %vm1195 = vcmask 1024
    %1196 = vst.msk [vmem:[%s10] sm:$0x3] %vm1195, %v1192
    // Predicated region
    $region46: #{tpu_custom_call.1} parent=1 // pred_check
      _
    $region47: #{tpu_custom_call.1} parent=1 // pred_check_branch
      %1198 = sbr.rel (0) target = $region49
    $region48: #{tpu_custom_call.1} parent=1 // pred_region
      _
    $region49: #{tpu_custom_call.1} parent=1 // pred_fallthru
      _
    // Predicated region
    $region50: #{tpu_custom_call.1} parent=1 // pred_check
      _
    $region51: #{tpu_custom_call.1} parent=1 // pred_check_branch
      %1200 = sbr.rel (0) target = $region53
    $region52: #{tpu_custom_call.1} parent=1 // pred_region
      _
    $region53: #{tpu_custom_call.1} parent=1 // pred_fallthru
      _
    %1201 = vsyncpa [#allocation4], 1

</llo_original>
